<compile_context>
chip_gen: v6e
topology: v6e:2x2x1
jax: 0.10.0
libtpu: 0.0.40
codegen_flags: <defaults>
</compile_context>

<pallas_src>
import jax
import jax.numpy as jnp
from jax import lax
from jax.experimental import pallas as pl
from jax.experimental.pallas import tpu as pltpu

EPS = 1e-5
LANE = 128


def _round_up(x, m):
    return (x + m - 1) // m * m


def _pick_row_tile(Ho, Wo, Cpad, budget_bytes=2 << 20):
    """Largest divisor of Ho whose f32 output tile stays under `budget_bytes`."""
    best = 1
    for t in range(1, Ho + 1):
        if Ho % t == 0 and t * Wo * Cpad * 4 <= budget_bytes:
            best = t
    return best


def conv_bn_2d(x_nchw, weight_oihw, gamma, beta, padding=1,
               compute_dtype=jnp.float32, row_tile=None):
    """Fused Conv2d(k, padding, stride=1, bias=False) + train-mode BatchNorm2d.

    x: NCHW, weight: OIHW (PyTorch conventions). Returns float32 NCHW.
    """
    N, Cin, H, W = x_nchw.shape
    Cout, _, KH, KW = weight_oihw.shape
    Ho = H + 2 * padding - KH + 1
    Wo = W + 2 * padding - KW + 1
    Hp = H + 2 * padding
    Wp = W + 2 * padding
    K = KH * KW * Cin
    Cpad = _round_up(Cout, LANE)        # lane-dense MXU output / stores

    # ---- wrapper glue: layout conversion, zero pad, im2col weight ----
    x_nhwc = jnp.transpose(x_nchw, (0, 2, 3, 1)).astype(compute_dtype)
    x_pad = jnp.pad(x_nhwc, ((0, 0), (padding, padding), (padding, padding), (0, 0)))
    w2 = jnp.transpose(weight_oihw, (2, 3, 1, 0)).astype(compute_dtype)  # (KH,KW,Cin,Cout)
    w2 = w2.reshape(K, Cout)
    w2 = jnp.pad(w2, ((0, 0), (0, Cpad - Cout)))                         # (K, Cpad)

    if row_tile is not None and Ho % row_tile == 0:
        TH = row_tile
    else:
        TH = _pick_row_tile(Ho, Wo, Cpad)
    RT = Ho // TH

    # -------------------- phase 1: conv + per-tile BN partials --------------------
    def conv_stats_kernel(x_ref, w_ref, y_ref, st_ref, patch_ref):
        # x_ref    : (Hp, Wp, Cin)      full padded image, resident per batch n
        # w_ref    : (K, Cpad)          im2col weight, resident
        # y_ref    : (TH, Wo, Cpad)     conv output tile (f32)
        # st_ref   : (2, Cpad)          [sum, sumsq] partials for this tile (f32)
        # patch_ref: (TH, Wo, K)        VMEM scratch: im2col patch (compute dtype)
        rt = pl.program_id(1)
        row0 = pl.multiple_of(rt * TH, TH)

        # Build the im2col patch once (tap order kh-major, then kw, then ci,
        # matching the (KH,KW,Cin,Cout)->(K,Cpad) weight reshape).
        for kh in range(KH):
            for kw in range(KW):
                c0 = (kh * KW + kw) * Cin
                patch_ref[:, :, c0:c0 + Cin] = \
                    x_ref[pl.ds(row0 + kh, TH), kw:kw + Wo, :]

        # One deep-K MXU matmul with f32 accumulation.
        patch = patch_ref[...].reshape(TH * Wo, K)
        acc = jnp.dot(patch, w_ref[...], preferred_element_type=jnp.float32)

        y_ref[...] = acc.reshape(TH, Wo, Cpad).astype(y_ref.dtype)
        st_ref[0:1, :] = jnp.sum(acc, axis=0, keepdims=True)
        st_ref[1:2, :] = jnp.sum(acc * acc, axis=0, keepdims=True)

    flops = 2 * N * Ho * Wo * K * Cout
    p1_bytes = (x_pad.size * x_pad.dtype.itemsize
                + w2.size * w2.dtype.itemsize
                + N * Ho * Wo * Cpad * 4
                + N * RT * 2 * Cpad * 4)

    y_conv, stats = pl.pallas_call(
        conv_stats_kernel,
        grid=(N, RT),
        in_specs=[
            # Whole padded image per n: index map ignores rt -> fetched once per image.
            pl.BlockSpec((None, Hp, Wp, Cin), lambda n, rt: (n, 0, 0, 0)),
            pl.BlockSpec((K, Cpad), lambda n, rt: (0, 0)),
        ],
        out_specs=(
            pl.BlockSpec((None, TH, Wo, Cpad), lambda n, rt: (n, rt, 0, 0)),
            pl.BlockSpec((None, None, 2, Cpad), lambda n, rt: (n, rt, 0, 0)),
        ),
        out_shape=(
            jax.ShapeDtypeStruct((N, Ho, Wo, Cpad), jnp.float32),
            jax.ShapeDtypeStruct((N, RT, 2, Cpad), jnp.float32),
        ),
        scratch_shapes=[pltpu.VMEM((TH, Wo, K), x_pad.dtype)],
        compiler_params=pltpu.CompilerParams(
            dimension_semantics=("parallel", "parallel"),
            # Conservative: fits v7x's 64 MiB physical VMEM; can be raised
            # toward ~96 MiB on v5e/v6e (128 MiB physical) for larger row tiles.
            vmem_limit_bytes=32 * 1024 * 1024,
        ),
        cost_estimate=pl.CostEstimate(
            flops=flops, transcendentals=0, bytes_accessed=p1_bytes),
    )(x_pad, w2)

    # ---- combine partial stats across all tiles / batch (tiny, exact BN) ----
    cnt = jnp.float32(N * Ho * Wo)
    ch_sum = jnp.sum(stats[:, :, 0, :], axis=(0, 1))       # (Cpad,)
    ch_sumsq = jnp.sum(stats[:, :, 1, :], axis=(0, 1))     # (Cpad,)
    mean = ch_sum / cnt
    # Clamp single-pass variance at 0 to guard against cancellation.
    var = jnp.maximum(ch_sumsq / cnt - mean * mean, 0.0)
    # TODO(synk): nn.BatchNorm2d's running_mean/running_var buffer updates are a
    # training-time side effect that does not affect the forward output; not emitted.
    g = jnp.pad(gamma.astype(jnp.float32).reshape(-1), (0, Cpad - Cout))
    b = jnp.pad(beta.astype(jnp.float32).reshape(-1), (0, Cpad - Cout))
    scale_vec = g * lax.rsqrt(var + EPS)
    shift_vec = b - mean * scale_vec
    scale = scale_vec.reshape(1, Cpad)
    shift = shift_vec.reshape(1, Cpad)

    # -------------------- phase 2: tiled normalize (fused affine) --------------------
    def bn_apply_kernel(yc_ref, scale_ref, shift_ref, o_ref):
        o_ref[...] = (yc_ref[...] * scale_ref[...] + shift_ref[...]).astype(o_ref.dtype)

    y_nhwc = pl.pallas_call(
        bn_apply_kernel,
        grid=(N, RT),
        in_specs=[
            pl.BlockSpec((None, TH, Wo, Cpad), lambda n, rt: (n, rt, 0, 0)),
            pl.BlockSpec((1, Cpad), lambda n, rt: (0, 0)),
            pl.BlockSpec((1, Cpad), lambda n, rt: (0, 0)),
        ],
        out_specs=pl.BlockSpec((None, TH, Wo, Cpad), lambda n, rt: (n, rt, 0, 0)),
        out_shape=jax.ShapeDtypeStruct((N, Ho, Wo, Cpad), jnp.float32),
        compiler_params=pltpu.CompilerParams(
            dimension_semantics=("parallel", "parallel"),
            vmem_limit_bytes=32 * 1024 * 1024,
        ),
        cost_estimate=pl.CostEstimate(
            flops=2 * N * Ho * Wo * Cpad, transcendentals=0,
            bytes_accessed=2 * N * Ho * Wo * Cpad * 4),
    )(y_conv, scale, shift)

    # drop channel padding, back to NCHW
    return jnp.transpose(y_nhwc[..., :Cout], (0, 3, 1, 2))


def reference(x_nchw, weight_oihw, gamma, beta, padding=1):
    """Plain-JAX reference matching PyTorch ConvBn2d.forward (train-mode BN)."""
    y = lax.conv_general_dilated(
        x_nchw.astype(jnp.float32), weight_oihw.astype(jnp.float32),
        window_strides=(1, 1),
        padding=((padding, padding), (padding, padding)),
        dimension_numbers=("NCHW", "OIHW", "NCHW"))
    mean = jnp.mean(y, axis=(0, 2, 3), keepdims=True)
    var = jnp.mean((y - mean) ** 2, axis=(0, 2, 3), keepdims=True)
    return ((y - mean) * lax.rsqrt(var + EPS)
            * gamma.reshape(1, -1, 1, 1) + beta.reshape(1, -1, 1, 1))


if __name__ == "__main__":
    key = jax.random.PRNGKey(0)
    kx, kw, kg, kb = jax.random.split(key, 4)

    N, Cin, H, W = 2, 4, 16, 16
    Cout, KH, KW = 8, 3, 3

    x = jax.random.normal(kx, (N, Cin, H, W), dtype=jnp.float32)
    weight = 0.1 * jax.random.normal(kw, (Cout, Cin, KH, KW), dtype=jnp.float32)
    gamma = 1.0 + 0.1 * jax.random.normal(kg, (Cout,), dtype=jnp.float32)
    beta = 0.1 * jax.random.normal(kb, (Cout,), dtype=jnp.float32)

    y_ref = jax.block_until_ready(reference(x, weight, gamma, beta, padding=1))

    # f32 path with a forced multi-tile grid (exercises cross-tile BN stat combine).
    y32 = jax.block_until_ready(
        conv_bn_2d(x, weight, gamma, beta, padding=1,
                   compute_dtype=jnp.float32, row_tile=8))
    assert y32.shape == (N, Cout, H, W), y32.shape
    err32 = float(jnp.max(jnp.abs(y32 - y_ref)))
    assert jnp.allclose(y32, y_ref, rtol=1e-4, atol=1e-4), err32

    # bf16 MXU-operand path (performance configuration), f32 accumulation.
    ybf = jax.block_until_ready(
        conv_bn_2d(x, weight, gamma, beta, padding=1,
                   compute_dtype=jnp.bfloat16))
    assert ybf.shape == (N, Cout, H, W), ybf.shape
    errbf = float(jnp.max(jnp.abs(ybf - y_ref)))
    assert jnp.allclose(ybf, y_ref, rtol=5e-2, atol=5e-2), errbf

    print("KERNEL_OK")
</pallas_src>

<mosaic_0001>
module attributes {stable_mosaic.version = 11 : i64} {
  func.func @conv_stats_kernel(%arg0: i32, %arg1: i32, %arg2: memref<1x18x18x4xf32, #tpu.memory_space<vmem>>, %arg3: memref<36x128xf32, #tpu.memory_space<vmem>>, %arg4: memref<1x8x16x128xf32, #tpu.memory_space<vmem>>, %arg5: memref<1x1x2x128xf32, #tpu.memory_space<vmem>>, %arg6: memref<8x16x36xf32, #tpu.memory_space<vmem>>) attributes {dimension_semantics = [#tpu.dimension_semantics<parallel>, #tpu.dimension_semantics<parallel>], iteration_bounds = array<i64: 2, 2>, scalar_prefetch = 0 : i64, scratch_operands = 1 : i64, tpu.core_type = #tpu.core_type<tc>, window_params = [{transform_indices = @transform_0, window_bounds = array<i64: 1, 18, 18, 4>}, {pipeline_mode = #tpu.pipeline_mode<synchronous>, transform_indices = @transform_1, window_bounds = array<i64: 36, 128>}, {transform_indices = @transform_2, window_bounds = array<i64: 1, 8, 16, 128>}, {transform_indices = @transform_3, window_bounds = array<i64: 1, 1, 2, 128>}]} {
    %c8_i32 = arith.constant 8 : i32
    %0 = arith.muli %arg1, %c8_i32 : i32
    %1 = tpu.assume_multiple %0, 8 : i32
    %c0_i32 = arith.constant 0 : i32
    %2 = arith.addi %1, %c0_i32 : i32
    %c0 = arith.constant 0 : index
    %3 = arith.index_cast %2 : i32 to index
    %c0_0 = arith.constant 0 : index
    %c0_1 = arith.constant 0 : index
    %4 = vector.load %arg2[%c0, %3, %c0_0, %c0_1] : memref<1x18x18x4xf32, #tpu.memory_space<vmem>>, vector<1x8x16x4xf32>
    %5 = vector.shape_cast %4 : vector<1x8x16x4xf32> to vector<8x16x4xf32>
    %c0_2 = arith.constant 0 : index
    %c0_3 = arith.constant 0 : index
    %c0_4 = arith.constant 0 : index
    %6 = vector.load %arg6[%c0_2, %c0_3, %c0_4] : memref<8x16x36xf32, #tpu.memory_space<vmem>>, vector<8x16x4xf32>
    tpu.vector_store %arg6[%c0_2, %c0_3, %c0_4], %5 {strides = array<i32>} : memref<8x16x36xf32, #tpu.memory_space<vmem>>, vector<8x16x4xf32>,
    %c0_i32_5 = arith.constant 0 : i32
    %7 = arith.addi %1, %c0_i32_5 : i32
    %c0_6 = arith.constant 0 : index
    %8 = arith.index_cast %7 : i32 to index
    %c1 = arith.constant 1 : index
    %c0_7 = arith.constant 0 : index
    %9 = vector.load %arg2[%c0_6, %8, %c1, %c0_7] : memref<1x18x18x4xf32, #tpu.memory_space<vmem>>, vector<1x8x16x4xf32>
    %10 = vector.shape_cast %9 : vector<1x8x16x4xf32> to vector<8x16x4xf32>
    %c0_8 = arith.constant 0 : index
    %c0_9 = arith.constant 0 : index
    %c4 = arith.constant 4 : index
    %11 = vector.load %arg6[%c0_8, %c0_9, %c4] : memref<8x16x36xf32, #tpu.memory_space<vmem>>, vector<8x16x4xf32>
    tpu.vector_store %arg6[%c0_8, %c0_9, %c4], %10 {strides = array<i32>} : memref<8x16x36xf32, #tpu.memory_space<vmem>>, vector<8x16x4xf32>,
    %c0_i32_10 = arith.constant 0 : i32
    %12 = arith.addi %1, %c0_i32_10 : i32
    %c0_11 = arith.constant 0 : index
    %13 = arith.index_cast %12 : i32 to index
    %c2 = arith.constant 2 : index
    %c0_12 = arith.constant 0 : index
    %14 = vector.load %arg2[%c0_11, %13, %c2, %c0_12] : memref<1x18x18x4xf32, #tpu.memory_space<vmem>>, vector<1x8x16x4xf32>
    %15 = vector.shape_cast %14 : vector<1x8x16x4xf32> to vector<8x16x4xf32>
    %c0_13 = arith.constant 0 : index
    %c0_14 = arith.constant 0 : index
    %c8 = arith.constant 8 : index
    %16 = vector.load %arg6[%c0_13, %c0_14, %c8] : memref<8x16x36xf32, #tpu.memory_space<vmem>>, vector<8x16x4xf32>
    tpu.vector_store %arg6[%c0_13, %c0_14, %c8], %15 {strides = array<i32>} : memref<8x16x36xf32, #tpu.memory_space<vmem>>, vector<8x16x4xf32>,
    %c1_i32 = arith.constant 1 : i32
    %17 = arith.addi %1, %c1_i32 : i32
    %c0_15 = arith.constant 0 : index
    %18 = arith.index_cast %17 : i32 to index
    %c0_16 = arith.constant 0 : index
    %c0_17 = arith.constant 0 : index
    %19 = vector.load %arg2[%c0_15, %18, %c0_16, %c0_17] : memref<1x18x18x4xf32, #tpu.memory_space<vmem>>, vector<1x8x16x4xf32>
    %20 = vector.shape_cast %19 : vector<1x8x16x4xf32> to vector<8x16x4xf32>
    %c0_18 = arith.constant 0 : index
    %c0_19 = arith.constant 0 : index
    %c12 = arith.constant 12 : index
    %21 = vector.load %arg6[%c0_18, %c0_19, %c12] : memref<8x16x36xf32, #tpu.memory_space<vmem>>, vector<8x16x4xf32>
    tpu.vector_store %arg6[%c0_18, %c0_19, %c12], %20 {strides = array<i32>} : memref<8x16x36xf32, #tpu.memory_space<vmem>>, vector<8x16x4xf32>,
    %c1_i32_20 = arith.constant 1 : i32
    %22 = arith.addi %1, %c1_i32_20 : i32
    %c0_21 = arith.constant 0 : index
    %23 = arith.index_cast %22 : i32 to index
    %c1_22 = arith.constant 1 : index
    %c0_23 = arith.constant 0 : index
    %24 = vector.load %arg2[%c0_21, %23, %c1_22, %c0_23] : memref<1x18x18x4xf32, #tpu.memory_space<vmem>>, vector<1x8x16x4xf32>
    %25 = vector.shape_cast %24 : vector<1x8x16x4xf32> to vector<8x16x4xf32>
    %c0_24 = arith.constant 0 : index
    %c0_25 = arith.constant 0 : index
    %c16 = arith.constant 16 : index
    %26 = vector.load %arg6[%c0_24, %c0_25, %c16] : memref<8x16x36xf32, #tpu.memory_space<vmem>>, vector<8x16x4xf32>
    tpu.vector_store %arg6[%c0_24, %c0_25, %c16], %25 {strides = array<i32>} : memref<8x16x36xf32, #tpu.memory_space<vmem>>, vector<8x16x4xf32>,
    %c1_i32_26 = arith.constant 1 : i32
    %27 = arith.addi %1, %c1_i32_26 : i32
    %c0_27 = arith.constant 0 : index
    %28 = arith.index_cast %27 : i32 to index
    %c2_28 = arith.constant 2 : index
    %c0_29 = arith.constant 0 : index
    %29 = vector.load %arg2[%c0_27, %28, %c2_28, %c0_29] : memref<1x18x18x4xf32, #tpu.memory_space<vmem>>, vector<1x8x16x4xf32>
    %30 = vector.shape_cast %29 : vector<1x8x16x4xf32> to vector<8x16x4xf32>
    %c0_30 = arith.constant 0 : index
    %c0_31 = arith.constant 0 : index
    %c20 = arith.constant 20 : index
    %31 = vector.load %arg6[%c0_30, %c0_31, %c20] : memref<8x16x36xf32, #tpu.memory_space<vmem>>, vector<8x16x4xf32>
    tpu.vector_store %arg6[%c0_30, %c0_31, %c20], %30 {strides = array<i32>} : memref<8x16x36xf32, #tpu.memory_space<vmem>>, vector<8x16x4xf32>,
    %c2_i32 = arith.constant 2 : i32
    %32 = arith.addi %1, %c2_i32 : i32
    %c0_32 = arith.constant 0 : index
    %33 = arith.index_cast %32 : i32 to index
    %c0_33 = arith.constant 0 : index
    %c0_34 = arith.constant 0 : index
    %34 = vector.load %arg2[%c0_32, %33, %c0_33, %c0_34] : memref<1x18x18x4xf32, #tpu.memory_space<vmem>>, vector<1x8x16x4xf32>
    %35 = vector.shape_cast %34 : vector<1x8x16x4xf32> to vector<8x16x4xf32>
    %c0_35 = arith.constant 0 : index
    %c0_36 = arith.constant 0 : index
    %c24 = arith.constant 24 : index
    %36 = vector.load %arg6[%c0_35, %c0_36, %c24] : memref<8x16x36xf32, #tpu.memory_space<vmem>>, vector<8x16x4xf32>
    tpu.vector_store %arg6[%c0_35, %c0_36, %c24], %35 {strides = array<i32>} : memref<8x16x36xf32, #tpu.memory_space<vmem>>, vector<8x16x4xf32>,
    %c2_i32_37 = arith.constant 2 : i32
    %37 = arith.addi %1, %c2_i32_37 : i32
    %c0_38 = arith.constant 0 : index
    %38 = arith.index_cast %37 : i32 to index
    %c1_39 = arith.constant 1 : index
    %c0_40 = arith.constant 0 : index
    %39 = vector.load %arg2[%c0_38, %38, %c1_39, %c0_40] : memref<1x18x18x4xf32, #tpu.memory_space<vmem>>, vector<1x8x16x4xf32>
    %40 = vector.shape_cast %39 : vector<1x8x16x4xf32> to vector<8x16x4xf32>
    %c0_41 = arith.constant 0 : index
    %c0_42 = arith.constant 0 : index
    %c28 = arith.constant 28 : index
    %41 = vector.load %arg6[%c0_41, %c0_42, %c28] : memref<8x16x36xf32, #tpu.memory_space<vmem>>, vector<8x16x4xf32>
    tpu.vector_store %arg6[%c0_41, %c0_42, %c28], %40 {strides = array<i32>} : memref<8x16x36xf32, #tpu.memory_space<vmem>>, vector<8x16x4xf32>,
    %c2_i32_43 = arith.constant 2 : i32
    %42 = arith.addi %1, %c2_i32_43 : i32
    %c0_44 = arith.constant 0 : index
    %43 = arith.index_cast %42 : i32 to index
    %c2_45 = arith.constant 2 : index
    %c0_46 = arith.constant 0 : index
    %44 = vector.load %arg2[%c0_44, %43, %c2_45, %c0_46] : memref<1x18x18x4xf32, #tpu.memory_space<vmem>>, vector<1x8x16x4xf32>
    %45 = vector.shape_cast %44 : vector<1x8x16x4xf32> to vector<8x16x4xf32>
    %c0_47 = arith.constant 0 : index
    %c0_48 = arith.constant 0 : index
    %c32 = arith.constant 32 : index
    %46 = vector.load %arg6[%c0_47, %c0_48, %c32] : memref<8x16x36xf32, #tpu.memory_space<vmem>>, vector<8x16x4xf32>
    tpu.vector_store %arg6[%c0_47, %c0_48, %c32], %45 {strides = array<i32>} : memref<8x16x36xf32, #tpu.memory_space<vmem>>, vector<8x16x4xf32>,
    %c0_49 = arith.constant 0 : index
    %c0_50 = arith.constant 0 : index
    %c0_51 = arith.constant 0 : index
    %47 = vector.load %arg6[%c0_49, %c0_50, %c0_51] : memref<8x16x36xf32, #tpu.memory_space<vmem>>, vector<8x16x36xf32>
    %48 = vector.shape_cast %47 : vector<8x16x36xf32> to vector<128x36xf32>
    %c0_52 = arith.constant 0 : index
    %c0_53 = arith.constant 0 : index
    %49 = vector.load %arg3[%c0_52, %c0_53] : memref<36x128xf32, #tpu.memory_space<vmem>>, vector<36x128xf32>
    %cst = arith.constant dense<0.000000e+00> : vector<128x128xf32>
    %50 = tpu.matmul %48, %49, %cst {dimension_numbers = #tpu.dot_dimension_numbers<[1], [0], [0], [1], [0, 0, 1, 1], [], []>} : vector<128x36xf32>, vector<36x128xf32>, vector<128x128xf32> -> vector<128x128xf32>
    %51 = vector.shape_cast %50 : vector<128x128xf32> to vector<8x16x128xf32>
    %c0_54 = arith.constant 0 : index
    %c0_55 = arith.constant 0 : index
    %c0_56 = arith.constant 0 : index
    %c0_57 = arith.constant 0 : index
    %52 = vector.load %arg4[%c0_54, %c0_55, %c0_56, %c0_57] : memref<1x8x16x128xf32, #tpu.memory_space<vmem>>, vector<1x8x16x128xf32>
    %53 = vector.shape_cast %52 : vector<1x8x16x128xf32> to vector<8x16x128xf32>
    %54 = vector.shape_cast %51 : vector<8x16x128xf32> to vector<1x8x16x128xf32>
    tpu.vector_store %arg4[%c0_54, %c0_55, %c0_56, %c0_57], %54 {strides = array<i32>} : memref<1x8x16x128xf32, #tpu.memory_space<vmem>>, vector<1x8x16x128xf32>,
    %cst_58 = arith.constant dense<0.000000e+00> : vector<128xf32>
    %55 = vector.multi_reduction <add>, %50, %cst_58 [0] : vector<128x128xf32> to vector<128xf32>
    %56 = vector.shape_cast %55 : vector<128xf32> to vector<1x128xf32>
    %c0_59 = arith.constant 0 : index
    %c0_60 = arith.constant 0 : index
    %c0_61 = arith.constant 0 : index
    %c0_62 = arith.constant 0 : index
    %57 = vector.load %arg5[%c0_59, %c0_60, %c0_61, %c0_62] : memref<1x1x2x128xf32, #tpu.memory_space<vmem>>, vector<1x1x1x128xf32>
    %58 = vector.shape_cast %57 : vector<1x1x1x128xf32> to vector<1x128xf32>
    %59 = vector.shape_cast %56 : vector<1x128xf32> to vector<1x1x1x128xf32>
    tpu.vector_store %arg5[%c0_59, %c0_60, %c0_61, %c0_62], %59 {strides = array<i32>} : memref<1x1x2x128xf32, #tpu.memory_space<vmem>>, vector<1x1x1x128xf32>,
    %60 = arith.mulf %50, %50 : vector<128x128xf32>
    %cst_63 = arith.constant dense<0.000000e+00> : vector<128xf32>
    %61 = vector.multi_reduction <add>, %60, %cst_63 [0] : vector<128x128xf32> to vector<128xf32>
    %62 = vector.shape_cast %61 : vector<128xf32> to vector<1x128xf32>
    %c0_64 = arith.constant 0 : index
    %c0_65 = arith.constant 0 : index
    %c1_66 = arith.constant 1 : index
    %c0_67 = arith.constant 0 : index
    %63 = vector.load %arg5[%c0_64, %c0_65, %c1_66, %c0_67] : memref<1x1x2x128xf32, #tpu.memory_space<vmem>>, vector<1x1x1x128xf32>
    %64 = vector.shape_cast %63 : vector<1x1x1x128xf32> to vector<1x128xf32>
    %65 = vector.shape_cast %62 : vector<1x128xf32> to vector<1x1x1x128xf32>
    tpu.vector_store %arg5[%c0_64, %c0_65, %c1_66, %c0_67], %65 {strides = array<i32>} : memref<1x1x2x128xf32, #tpu.memory_space<vmem>>, vector<1x1x1x128xf32>,
    return
  }
  func.func @transform_0(%arg0: i32, %arg1: i32) -> (i32, i32, i32, i32) {
    %c0_i32 = arith.constant 0 : i32
    %c0_i32_0 = arith.constant 0 : i32
    %c0_i32_1 = arith.constant 0 : i32
    %c0_i32_2 = arith.constant 0 : i32
    return %arg0, %c0_i32, %c0_i32_0, %c0_i32_1 : i32, i32, i32, i32
  }
  func.func @transform_1(%arg0: i32, %arg1: i32) -> (i32, i32) {
    %c0_i32 = arith.constant 0 : i32
    %c0_i32_0 = arith.constant 0 : i32
    %c0_i32_1 = arith.constant 0 : i32
    return %c0_i32, %c0_i32_0 : i32, i32
  }
  func.func @transform_2(%arg0: i32, %arg1: i32) -> (i32, i32, i32, i32) {
    %c0_i32 = arith.constant 0 : i32
    %c0_i32_0 = arith.constant 0 : i32
    %c0_i32_1 = arith.constant 0 : i32
    return %arg0, %arg1, %c0_i32, %c0_i32_0 : i32, i32, i32, i32
  }
  func.func @transform_3(%arg0: i32, %arg1: i32) -> (i32, i32, i32, i32) {
    %c0_i32 = arith.constant 0 : i32
    %c0_i32_0 = arith.constant 0 : i32
    %c0_i32_1 = arith.constant 0 : i32
    return %arg0, %arg1, %c0_i32, %c0_i32_0 : i32, i32, i32, i32
  }
}

</mosaic_0001>

<llo_original>
// kernel: tpu_custom_call.1
$region0: #{tpu_custom_call.1}
  #allocation0 [shape = 'u32[]', space=smem, size = 0x4, offset = 0x4, fixed_abs, tag = 'smem constant byte address 0x4 - core index']
  #allocation1 [shape = 'u32[144,128]{1,0:T(1,128)}', space=vmem, size = 0x12000, scoped, tag = 'internal scratch']
  #allocation2 [shape = 'f32[8,16,36]{2,1,0:T(8,128)}', space=vmem, size = 0x10000, scoped, tag = 'scratch operand']
  %s0 = inlined_call_operand.vmem [shape: f32[2,18,18,4], index: 0, kind: input, shape index: {}]
  %s1 = inlined_call_operand.vmem [shape: f32[36,128], index: 1, kind: input, shape index: {}]
  %s2 = inlined_call_operand.hbm [shape: f32[2,16,16,128], index: 2, kind: output, shape index: {0}]
  %s3 = inlined_call_operand.hbm [shape: f32[2,2,2,128], index: 3, kind: output, shape index: {1}]
  %4 = xla_tuple %s2, %s3
  %s5 = sld [smem:[#allocation0]]
  $region49: #{tpu_custom_call.1} parent=0
    _
  %s7 = ssub.s32 1, %s5
  %s8 = scalar_select 0, %s7, %s5
  $region1: #{tpu_custom_call.1} parent=0
    #allocation3 [shape = 'u8[131072]{0}', space=vmem, size = 0x20000, scoped, tag = 'output window, operand 0']
    #allocation4 [shape = 's32[2]{0}', space=sflag, size = 0x8, scoped, tag = 'scoped memory for tpu_custom_call.1']
    #allocation5 [shape = 'u8[2048]{0}', space=vmem, size = 0x800, scoped, tag = 'output window, operand 1']
    #allocation6 [shape = 's32[2]{0}', space=sflag, size = 0x8, scoped, tag = 'scoped memory for tpu_custom_call.1']
    %9 = vsyncpa [#allocation4], 0
    %s10 = scalar_lea.sflag [#allocation4], 1
    %11 = vsyncpa %s10, 0
    %12 = vsyncpa [#allocation6], 0
    %s13 = scalar_lea.sflag [#allocation6], 1
    %14 = vsyncpa %s13, 0
    loop: start=0, step=1, limit=6
    $region2: #{tpu_custom_call.1} parent=1 // loop_pre_header
      _
    $region3: #{tpu_custom_call.1} parent=1 // loop_header
      %s16 = sphi 0, %s20
      %p17 = scmp.ge.s32.totalorder %s16, 6
      %s23 = sphi 0, %s35
      %s24 = sphi 0, %s31
      %s25 = sphi 0, %s23
      %s26 = sphi 0, %s24
      %s27 = sphi 0, %s25
      %s28 = sphi 0, %s26
      %s38 = sphi 0, %s40
      %s41 = sphi 0, %s38
      %s42 = sphi 0, %s41
      %s58 = sphi 0, %s42
      %s62 = sphi 0, %s62
      %s64 = sphi 0, %s62
      %s65 = sphi 0, %s64
      %s79 = sphi 0, %s65
      %s87 = sphi 0, %s89
      %s90 = sphi 0, %s87
      %s91 = sphi 0, %s90
      %s107 = sphi 0, %s91
      %s115 = sphi 0, %s117
      %s118 = sphi 0, %s115
      %s119 = sphi 0, %s118
      %s135 = sphi 0, %s119
    $region4: #{tpu_custom_call.1} parent=1 // loop_header_branch
      %19 = sbr.rel (%p17) target = $region8
    $region5: #{tpu_custom_call.1} parent=1 // loop_body
      %s21 = ssub.s32 %s16, 1
      %s22 = ssub.s32 %s16, 2
      %s29 = sadd.s32 1, %s24
      %p30 = scmp.ge.s32.totalorder %s29, 2
      %s31 = scalar_select %p30, 0, %s29
      %s32 = sadd.s32 1, %s23
      %s33 = scalar_select %p30, %s32, %s23
      %p34 = scmp.ge.s32.totalorder %s33, 2
      %s35 = scalar_select %p34, 0, %s33
      %s36 = ssub.s32 %s23, %s35
      %p37 = scmp.eq.s32.totalorder %s36, 0
      %s39 = sadd.s32 %s38, 1
      %s40 = scalar_select %p37, %s38, %s39
      %p43 = pneg %p37
      %p44 = scmp.eq.s32.totalorder %s16, 3
      %p45 = por %p43, %p44
      %p46 = scmp.ne.s32.totalorder %s38, %s41
      %p47 = scmp.eq.s32.totalorder %s16, 0
      %p48 = por %p46, %p47
      %p49 = scmp.ne.s32.totalorder %s38, %s41
      %p50 = scmp.eq.s32.totalorder %s21, 3
      %p51 = por %p49, %p50
      %p52 = scmp.ne.s32.totalorder %s41, %s42
      %p53 = scmp.eq.s32.totalorder %s21, 0
      %p54 = por %p52, %p53
      %p55 = scmp.ne.s32.totalorder %s41, %s42
      %p56 = scmp.eq.s32.totalorder %s22, 3
      %p57 = por %p55, %p56
      %p59 = scmp.ne.s32.totalorder %s42, %s58
      %p60 = scmp.eq.s32.totalorder %s22, 0
      %p61 = por %p59, %p60
      %s63 = sadd.s32 %s62, 1
      %p66 = scmp.eq.s32.totalorder %s16, 3
      %p67 = scmp.ne.s32.totalorder %s62, %s64
      %p68 = scmp.eq.s32.totalorder %s16, 0
      %p69 = por %p67, %p68
      %p70 = scmp.ne.s32.totalorder %s62, %s64
      %p71 = scmp.eq.s32.totalorder %s21, 3
      %p72 = por %p70, %p71
      %p73 = scmp.ne.s32.totalorder %s64, %s65
      %p74 = scmp.eq.s32.totalorder %s21, 0
      %p75 = por %p73, %p74
      %p76 = scmp.ne.s32.totalorder %s64, %s65
      %p77 = scmp.eq.s32.totalorder %s22, 3
      %p78 = por %p76, %p77
      %p80 = scmp.ne.s32.totalorder %s65, %s79
      %p81 = scmp.eq.s32.totalorder %s22, 0
      %p82 = por %p80, %p81
      %s83 = ssub.s32 %s23, %s35
      %s84 = ssub.s32 %s24, %s31
      %s85 = sor.u32 %s83, %s84
      %p86 = scmp.eq.s32.totalorder %s85, 0
      %s88 = sadd.s32 %s87, 1
      %s89 = scalar_select %p86, %s87, %s88
      %p92 = pneg %p86
      %p93 = scmp.eq.s32.totalorder %s16, 3
      %p94 = por %p92, %p93
      %p95 = scmp.ne.s32.totalorder %s87, %s90
      %p96 = scmp.eq.s32.totalorder %s16, 0
      %p97 = por %p95, %p96
      %p98 = scmp.ne.s32.totalorder %s87, %s90
      %p99 = scmp.eq.s32.totalorder %s21, 3
      %p100 = por %p98, %p99
      %p101 = scmp.ne.s32.totalorder %s90, %s91
      %p102 = scmp.eq.s32.totalorder %s21, 0
      %p103 = por %p101, %p102
      %p104 = scmp.ne.s32.totalorder %s90, %s91
      %p105 = scmp.eq.s32.totalorder %s22, 3
      %p106 = por %p104, %p105
      %p108 = scmp.ne.s32.totalorder %s91, %s107
      %p109 = scmp.eq.s32.totalorder %s22, 0
      %p110 = por %p108, %p109
      %s111 = ssub.s32 %s23, %s35
      %s112 = ssub.s32 %s24, %s31
      %s113 = sor.u32 %s111, %s112
      %p114 = scmp.eq.s32.totalorder %s113, 0
      %s116 = sadd.s32 %s115, 1
      %s117 = scalar_select %p114, %s115, %s116
      %p120 = pneg %p114
      %p121 = scmp.eq.s32.totalorder %s16, 3
      %p122 = por %p120, %p121
      %p123 = scmp.ne.s32.totalorder %s115, %s118
      %p124 = scmp.eq.s32.totalorder %s16, 0
      %p125 = por %p123, %p124
      %p126 = scmp.ne.s32.totalorder %s115, %s118
      %p127 = scmp.eq.s32.totalorder %s21, 3
      %p128 = por %p126, %p127
      %p129 = scmp.ne.s32.totalorder %s118, %s119
      %p130 = scmp.eq.s32.totalorder %s21, 0
      %p131 = por %p129, %p130
      %p132 = scmp.ne.s32.totalorder %s118, %s119
      %p133 = scmp.eq.s32.totalorder %s22, 3
      %p134 = por %p132, %p133
      %p136 = scmp.ne.s32.totalorder %s119, %s135
      %p137 = scmp.eq.s32.totalorder %s22, 0
      %p138 = por %p136, %p137
      %p139 = scmp.le.s32.totalorder 1, %s16
      %p140 = scmp.lt.s32.totalorder %s16, 5
      %p141 = pnand %p139, %p140
      %p142 = pneg %p141
      // Predicated region
      $region9: #{tpu_custom_call.1} parent=5 // pred_check
        _
      $region10: #{tpu_custom_call.1} parent=5 // pred_check_branch
        %144 = sbr.rel (%p141) target = $region12
      $region11: #{tpu_custom_call.1} parent=5 // pred_region
        %s145 = ssub.s32 %s16, 1
        // Predicated region
        $region13: #{tpu_custom_call.1} parent=11 // pred_check
          %p146 = pneg %p75
        $region14: #{tpu_custom_call.1} parent=11 // pred_check_branch
          %148 = sbr.rel (%p146) target = $region16
        $region15: #{tpu_custom_call.1} parent=11 // pred_region
          _
        $region16: #{tpu_custom_call.1} parent=11 // pred_fallthru
          _
      $region12: #{tpu_custom_call.1} parent=5 // pred_fallthru
        _
      %p149 = scmp.lt.s32.totalorder %s16, 4
      // Predicated region
      $region17: #{tpu_custom_call.1} parent=5 // pred_check
        %p150 = pneg %p149
      $region18: #{tpu_custom_call.1} parent=5 // pred_check_branch
        %152 = sbr.rel (%p150) target = $region20
      $region19: #{tpu_custom_call.1} parent=5 // pred_region
        // Predicated region
        $region21: #{tpu_custom_call.1} parent=19 // pred_check
          %p153 = pneg %p48
        $region22: #{tpu_custom_call.1} parent=19 // pred_check_branch
          %155 = sbr.rel (%p153) target = $region24
        $region23: #{tpu_custom_call.1} parent=19 // pred_region
          %p156 = scmp.lt.s32.totalorder %s23, 1
          %s157 = scalar_select %p156, %s23, 1
          %s158 = smul.addr %s157, 54
          %s159 = smul.addr %s158, 8
          %s160 = scalar_lea.vmem %s0, %s159
        $region24: #{tpu_custom_call.1} parent=19 // pred_fallthru
          _
      $region20: #{tpu_custom_call.1} parent=5 // pred_fallthru
        _
      %p161 = scmp.le.s32.totalorder 1, %s16
      %p162 = scmp.lt.s32.totalorder %s16, 5
      %p163 = pnand %p161, %p162
      %p164 = pneg %p163
      // Predicated region
      $region25: #{tpu_custom_call.1} parent=5 // pred_check
        _
      $region26: #{tpu_custom_call.1} parent=5 // pred_check_branch
        %166 = sbr.rel (%p163) target = $region28
      $region27: #{tpu_custom_call.1} parent=5 // pred_region
        %s167 = ssub.s32 %s16, 1
        %p168 = scmp.lt.s32.totalorder %s25, 1
        %s169 = scalar_select %p168, %s25, 1
        %s170 = smul.addr %s169, 54
        %s171 = smul.addr %s170, 8
        %s172 = scalar_lea.vmem %s0, %s171
        %p173 = pneg %p54
        %p174 = pneg %p51
        %p175 = pneg %p75
        %p176 = pneg %p72
        %p177 = pneg %p103
        %p178 = pneg %p100
        %s179 = sand.u32 %s90, 1
        %s180 = scalar_lea.sflag [#allocation4], %s179
        %s181 = sand.u32 %s90, 1
        %s182 = smul.addr %s181, 128
        %s183 = scalar_lea.vmem [#allocation3], %s182
        %p184 = pneg %p131
        %p185 = pneg %p128
        %s186 = sand.u32 %s118, 1
        %s187 = scalar_lea.sflag [#allocation6], %s186
        %s188 = sand.u32 %s118, 1
        %s189 = smul.addr %s188, 2
        %s190 = scalar_lea.vmem [#allocation5], %s189
        %p191 = scmp.lt.s32.totalorder %s25, 1
        %s192 = scalar_select %p191, %s25, 1
        %s193 = smul.addr %s192, 54
        %s194 = smul.addr %s193, 8
        %s195 = scalar_lea.vmem %s0, %s194
        %s196 = smul.u32 8, %s26
        %s197 = smul.u32 %s26, 8
        %s198 = smul.u32 %s197, 24
        %s199 = scalar_lea.vmem %s195, %s198
        %v200 = vld [vmem:[%s199] sm:$0xff]
        %v201 = vld [vmem:[%s199 + $0x8] sm:$0xff]
        %v202 = vld [vmem:[%s199 + $0x18] sm:$0xff]
        %v203 = vld [vmem:[%s199 + $0x20] sm:$0xff]
        %v204 = vld [vmem:[%s199 + $0x30] sm:$0xff]
        %v205 = vld [vmem:[%s199 + $0x38] sm:$0xff]
        %v206 = vld [vmem:[%s199 + $0x48] sm:$0xff]
        %v207 = vld [vmem:[%s199 + $0x50] sm:$0xff]
        %v208 = vld [vmem:[%s199 + $0x60] sm:$0xff]
        %v209 = vld [vmem:[%s199 + $0x68] sm:$0xff]
        %v210 = vld [vmem:[%s199 + $0x78] sm:$0xff]
        %v211 = vld [vmem:[%s199 + $0x80] sm:$0xff]
        %v212 = vld [vmem:[%s199 + $0x90] sm:$0xff]
        %v213 = vld [vmem:[%s199 + $0x98] sm:$0xff]
        %v214 = vld [vmem:[%s199 + $0xa8] sm:$0xff]
        %v215 = vld [vmem:[%s199 + $0xb0] sm:$0xff]
        %vm216 = vcmask 31744
        %217 = vst.msk [vmem:[#allocation2] sm:$0xff] %vm216, %v200
        %218 = vst.msk [vmem:[#allocation2 + $0x8] sm:$0xff] %vm216, %v201
        %219 = vst.msk [vmem:[#allocation2 + $0x10] sm:$0xff] %vm216, %v202
        %220 = vst.msk [vmem:[#allocation2 + $0x18] sm:$0xff] %vm216, %v203
        %221 = vst.msk [vmem:[#allocation2 + $0x20] sm:$0xff] %vm216, %v204
        %222 = vst.msk [vmem:[#allocation2 + $0x28] sm:$0xff] %vm216, %v205
        %223 = vst.msk [vmem:[#allocation2 + $0x30] sm:$0xff] %vm216, %v206
        %224 = vst.msk [vmem:[#allocation2 + $0x38] sm:$0xff] %vm216, %v207
        %225 = vst.msk [vmem:[#allocation2 + $0x40] sm:$0xff] %vm216, %v208
        %226 = vst.msk [vmem:[#allocation2 + $0x48] sm:$0xff] %vm216, %v209
        %227 = vst.msk [vmem:[#allocation2 + $0x50] sm:$0xff] %vm216, %v210
        %228 = vst.msk [vmem:[#allocation2 + $0x58] sm:$0xff] %vm216, %v211
        %229 = vst.msk [vmem:[#allocation2 + $0x60] sm:$0xff] %vm216, %v212
        %230 = vst.msk [vmem:[#allocation2 + $0x68] sm:$0xff] %vm216, %v213
        %231 = vst.msk [vmem:[#allocation2 + $0x70] sm:$0xff] %vm216, %v214
        %232 = vst.msk [vmem:[#allocation2 + $0x78] sm:$0xff] %vm216, %v215
        %v233 = vld [vmem:[%s199 + $0x1] sm:$0xff]
        %v234 = vld [vmem:[%s199 + $0x9] sm:$0xff]
        %v235 = vld [vmem:[%s199 + $0x19] sm:$0xff]
        %v236 = vld [vmem:[%s199 + $0x21] sm:$0xff]
        %v237 = vld [vmem:[%s199 + $0x31] sm:$0xff]
        %v238 = vld [vmem:[%s199 + $0x39] sm:$0xff]
        %v239 = vld [vmem:[%s199 + $0x49] sm:$0xff]
        %v240 = vld [vmem:[%s199 + $0x51] sm:$0xff]
        %v241 = vld [vmem:[%s199 + $0x61] sm:$0xff]
        %v242 = vld [vmem:[%s199 + $0x69] sm:$0xff]
        %v243 = vld [vmem:[%s199 + $0x79] sm:$0xff]
        %v244 = vld [vmem:[%s199 + $0x81] sm:$0xff]
        %v245 = vld [vmem:[%s199 + $0x91] sm:$0xff]
        %v246 = vld [vmem:[%s199 + $0x99] sm:$0xff]
        %v247 = vld [vmem:[%s199 + $0xa9] sm:$0xff]
        %v248 = vld [vmem:[%s199 + $0xb1] sm:$0xff]
        %265 = vrot.lane.b32.xlu0 %v233, 4
        %v266 = vpop.permute.xlu0 %265
        %267 = vrot.lane.b32.xlu0 %v234, 4
        %v268 = vpop.permute.xlu0 %267
        %269 = vrot.lane.b32.xlu0 %v235, 4
        %v270 = vpop.permute.xlu0 %269
        %271 = vrot.lane.b32.xlu0 %v236, 4
        %v272 = vpop.permute.xlu0 %271
        %273 = vrot.lane.b32.xlu0 %v237, 4
        %v274 = vpop.permute.xlu0 %273
        %275 = vrot.lane.b32.xlu0 %v238, 4
        %v276 = vpop.permute.xlu0 %275
        %277 = vrot.lane.b32.xlu0 %v239, 4
        %v278 = vpop.permute.xlu0 %277
        %279 = vrot.lane.b32.xlu0 %v240, 4
        %v280 = vpop.permute.xlu0 %279
        %281 = vrot.lane.b32.xlu0 %v241, 4
        %v282 = vpop.permute.xlu0 %281
        %283 = vrot.lane.b32.xlu0 %v242, 4
        %v284 = vpop.permute.xlu0 %283
        %285 = vrot.lane.b32.xlu0 %v243, 4
        %v286 = vpop.permute.xlu0 %285
        %287 = vrot.lane.b32.xlu0 %v244, 4
        %v288 = vpop.permute.xlu0 %287
        %289 = vrot.lane.b32.xlu0 %v245, 4
        %v290 = vpop.permute.xlu0 %289
        %291 = vrot.lane.b32.xlu0 %v246, 4
        %v292 = vpop.permute.xlu0 %291
        %293 = vrot.lane.b32.xlu0 %v247, 4
        %v294 = vpop.permute.xlu0 %293
        %295 = vrot.lane.b32.xlu0 %v248, 4
        %v296 = vpop.permute.xlu0 %295
        %vm313 = vcmask 64544
        %314 = vst.msk [vmem:[#allocation2] sm:$0xff] %vm313, %v266
        %315 = vst.msk [vmem:[#allocation2 + $0x8] sm:$0xff] %vm313, %v268
        %316 = vst.msk [vmem:[#allocation2 + $0x10] sm:$0xff] %vm313, %v270
        %317 = vst.msk [vmem:[#allocation2 + $0x18] sm:$0xff] %vm313, %v272
        %318 = vst.msk [vmem:[#allocation2 + $0x20] sm:$0xff] %vm313, %v274
        %319 = vst.msk [vmem:[#allocation2 + $0x28] sm:$0xff] %vm313, %v276
        %320 = vst.msk [vmem:[#allocation2 + $0x30] sm:$0xff] %vm313, %v278
        %321 = vst.msk [vmem:[#allocation2 + $0x38] sm:$0xff] %vm313, %v280
        %322 = vst.msk [vmem:[#allocation2 + $0x40] sm:$0xff] %vm313, %v282
        %323 = vst.msk [vmem:[#allocation2 + $0x48] sm:$0xff] %vm313, %v284
        %324 = vst.msk [vmem:[#allocation2 + $0x50] sm:$0xff] %vm313, %v286
        %325 = vst.msk [vmem:[#allocation2 + $0x58] sm:$0xff] %vm313, %v288
        %326 = vst.msk [vmem:[#allocation2 + $0x60] sm:$0xff] %vm313, %v290
        %327 = vst.msk [vmem:[#allocation2 + $0x68] sm:$0xff] %vm313, %v292
        %328 = vst.msk [vmem:[#allocation2 + $0x70] sm:$0xff] %vm313, %v294
        %329 = vst.msk [vmem:[#allocation2 + $0x78] sm:$0xff] %vm313, %v296
        %v330 = vld [vmem:[%s199 + $0x2] sm:$0xff]
        %v331 = vld [vmem:[%s199 + $0xa] sm:$0xff]
        %v332 = vld [vmem:[%s199 + $0x1a] sm:$0xff]
        %v333 = vld [vmem:[%s199 + $0x22] sm:$0xff]
        %v334 = vld [vmem:[%s199 + $0x32] sm:$0xff]
        %v335 = vld [vmem:[%s199 + $0x3a] sm:$0xff]
        %v336 = vld [vmem:[%s199 + $0x4a] sm:$0xff]
        %v337 = vld [vmem:[%s199 + $0x52] sm:$0xff]
        %v338 = vld [vmem:[%s199 + $0x62] sm:$0xff]
        %v339 = vld [vmem:[%s199 + $0x6a] sm:$0xff]
        %v340 = vld [vmem:[%s199 + $0x7a] sm:$0xff]
        %v341 = vld [vmem:[%s199 + $0x82] sm:$0xff]
        %v342 = vld [vmem:[%s199 + $0x92] sm:$0xff]
        %v343 = vld [vmem:[%s199 + $0x9a] sm:$0xff]
        %v344 = vld [vmem:[%s199 + $0xaa] sm:$0xff]
        %v345 = vld [vmem:[%s199 + $0xb2] sm:$0xff]
        %362 = vrot.lane.b32.xlu0 %v330, 8
        %v363 = vpop.permute.xlu0 %362
        %364 = vrot.lane.b32.xlu0 %v331, 8
        %v365 = vpop.permute.xlu0 %364
        %366 = vrot.lane.b32.xlu0 %v332, 8
        %v367 = vpop.permute.xlu0 %366
        %368 = vrot.lane.b32.xlu0 %v333, 8
        %v369 = vpop.permute.xlu0 %368
        %370 = vrot.lane.b32.xlu0 %v334, 8
        %v371 = vpop.permute.xlu0 %370
        %372 = vrot.lane.b32.xlu0 %v335, 8
        %v373 = vpop.permute.xlu0 %372
        %374 = vrot.lane.b32.xlu0 %v336, 8
        %v375 = vpop.permute.xlu0 %374
        %376 = vrot.lane.b32.xlu0 %v337, 8
        %v377 = vpop.permute.xlu0 %376
        %378 = vrot.lane.b32.xlu0 %v338, 8
        %v379 = vpop.permute.xlu0 %378
        %380 = vrot.lane.b32.xlu0 %v339, 8
        %v381 = vpop.permute.xlu0 %380
        %382 = vrot.lane.b32.xlu0 %v340, 8
        %v383 = vpop.permute.xlu0 %382
        %384 = vrot.lane.b32.xlu0 %v341, 8
        %v385 = vpop.permute.xlu0 %384
        %386 = vrot.lane.b32.xlu0 %v342, 8
        %v387 = vpop.permute.xlu0 %386
        %388 = vrot.lane.b32.xlu0 %v343, 8
        %v389 = vpop.permute.xlu0 %388
        %390 = vrot.lane.b32.xlu0 %v344, 8
        %v391 = vpop.permute.xlu0 %390
        %392 = vrot.lane.b32.xlu0 %v345, 8
        %v393 = vpop.permute.xlu0 %392
        %vm410 = vcmask 97344
        %411 = vst.msk [vmem:[#allocation2] sm:$0xff] %vm410, %v363
        %412 = vst.msk [vmem:[#allocation2 + $0x8] sm:$0xff] %vm410, %v365
        %413 = vst.msk [vmem:[#allocation2 + $0x10] sm:$0xff] %vm410, %v367
        %414 = vst.msk [vmem:[#allocation2 + $0x18] sm:$0xff] %vm410, %v369
        %415 = vst.msk [vmem:[#allocation2 + $0x20] sm:$0xff] %vm410, %v371
        %416 = vst.msk [vmem:[#allocation2 + $0x28] sm:$0xff] %vm410, %v373
        %417 = vst.msk [vmem:[#allocation2 + $0x30] sm:$0xff] %vm410, %v375
        %418 = vst.msk [vmem:[#allocation2 + $0x38] sm:$0xff] %vm410, %v377
        %419 = vst.msk [vmem:[#allocation2 + $0x40] sm:$0xff] %vm410, %v379
        %420 = vst.msk [vmem:[#allocation2 + $0x48] sm:$0xff] %vm410, %v381
        %421 = vst.msk [vmem:[#allocation2 + $0x50] sm:$0xff] %vm410, %v383
        %422 = vst.msk [vmem:[#allocation2 + $0x58] sm:$0xff] %vm410, %v385
        %423 = vst.msk [vmem:[#allocation2 + $0x60] sm:$0xff] %vm410, %v387
        %424 = vst.msk [vmem:[#allocation2 + $0x68] sm:$0xff] %vm410, %v389
        %425 = vst.msk [vmem:[#allocation2 + $0x70] sm:$0xff] %vm410, %v391
        %426 = vst.msk [vmem:[#allocation2 + $0x78] sm:$0xff] %vm410, %v393
        %s427 = sadd.s32 %s197, 1
        %s428 = smul.u32 %s427, 24
        %s429 = scalar_lea.vmem %s195, %s428
        %v430 = vld [vmem:[%s429] sm:$0xff]
        %v431 = vld [vmem:[%s429 + $0x8] sm:$0xff]
        %v432 = vld [vmem:[%s429 + $0x18] sm:$0xff]
        %v433 = vld [vmem:[%s429 + $0x20] sm:$0xff]
        %v434 = vld [vmem:[%s429 + $0x30] sm:$0xff]
        %v435 = vld [vmem:[%s429 + $0x38] sm:$0xff]
        %v436 = vld [vmem:[%s429 + $0x48] sm:$0xff]
        %v437 = vld [vmem:[%s429 + $0x50] sm:$0xff]
        %v438 = vld [vmem:[%s429 + $0x60] sm:$0xff]
        %v439 = vld [vmem:[%s429 + $0x68] sm:$0xff]
        %v440 = vld [vmem:[%s429 + $0x78] sm:$0xff]
        %v441 = vld [vmem:[%s429 + $0x80] sm:$0xff]
        %v442 = vld [vmem:[%s429 + $0x90] sm:$0xff]
        %v443 = vld [vmem:[%s429 + $0x98] sm:$0xff]
        %v444 = vld [vmem:[%s429 + $0xa8] sm:$0xff]
        %v445 = vld [vmem:[%s429 + $0xb0] sm:$0xff]
        %462 = vrot.lane.b32.xlu0 %v430, 12
        %v463 = vpop.permute.xlu0 %462
        %464 = vrot.lane.b32.xlu0 %v431, 12
        %v465 = vpop.permute.xlu0 %464
        %466 = vrot.lane.b32.xlu0 %v432, 12
        %v467 = vpop.permute.xlu0 %466
        %468 = vrot.lane.b32.xlu0 %v433, 12
        %v469 = vpop.permute.xlu0 %468
        %470 = vrot.lane.b32.xlu0 %v434, 12
        %v471 = vpop.permute.xlu0 %470
        %472 = vrot.lane.b32.xlu0 %v435, 12
        %v473 = vpop.permute.xlu0 %472
        %474 = vrot.lane.b32.xlu0 %v436, 12
        %v475 = vpop.permute.xlu0 %474
        %476 = vrot.lane.b32.xlu0 %v437, 12
        %v477 = vpop.permute.xlu0 %476
        %478 = vrot.lane.b32.xlu0 %v438, 12
        %v479 = vpop.permute.xlu0 %478
        %480 = vrot.lane.b32.xlu0 %v439, 12
        %v481 = vpop.permute.xlu0 %480
        %482 = vrot.lane.b32.xlu0 %v440, 12
        %v483 = vpop.permute.xlu0 %482
        %484 = vrot.lane.b32.xlu0 %v441, 12
        %v485 = vpop.permute.xlu0 %484
        %486 = vrot.lane.b32.xlu0 %v442, 12
        %v487 = vpop.permute.xlu0 %486
        %488 = vrot.lane.b32.xlu0 %v443, 12
        %v489 = vpop.permute.xlu0 %488
        %490 = vrot.lane.b32.xlu0 %v444, 12
        %v491 = vpop.permute.xlu0 %490
        %492 = vrot.lane.b32.xlu0 %v445, 12
        %v493 = vpop.permute.xlu0 %492
        %vm510 = vcmask 130144
        %511 = vst.msk [vmem:[#allocation2] sm:$0xff] %vm510, %v463
        %512 = vst.msk [vmem:[#allocation2 + $0x8] sm:$0xff] %vm510, %v465
        %513 = vst.msk [vmem:[#allocation2 + $0x10] sm:$0xff] %vm510, %v467
        %514 = vst.msk [vmem:[#allocation2 + $0x18] sm:$0xff] %vm510, %v469
        %515 = vst.msk [vmem:[#allocation2 + $0x20] sm:$0xff] %vm510, %v471
        %516 = vst.msk [vmem:[#allocation2 + $0x28] sm:$0xff] %vm510, %v473
        %517 = vst.msk [vmem:[#allocation2 + $0x30] sm:$0xff] %vm510, %v475
        %518 = vst.msk [vmem:[#allocation2 + $0x38] sm:$0xff] %vm510, %v477
        %519 = vst.msk [vmem:[#allocation2 + $0x40] sm:$0xff] %vm510, %v479
        %520 = vst.msk [vmem:[#allocation2 + $0x48] sm:$0xff] %vm510, %v481
        %521 = vst.msk [vmem:[#allocation2 + $0x50] sm:$0xff] %vm510, %v483
        %522 = vst.msk [vmem:[#allocation2 + $0x58] sm:$0xff] %vm510, %v485
        %523 = vst.msk [vmem:[#allocation2 + $0x60] sm:$0xff] %vm510, %v487
        %524 = vst.msk [vmem:[#allocation2 + $0x68] sm:$0xff] %vm510, %v489
        %525 = vst.msk [vmem:[#allocation2 + $0x70] sm:$0xff] %vm510, %v491
        %526 = vst.msk [vmem:[#allocation2 + $0x78] sm:$0xff] %vm510, %v493
        %v527 = vld [vmem:[%s429 + $0x1] sm:$0xff]
        %v528 = vld [vmem:[%s429 + $0x9] sm:$0xff]
        %v529 = vld [vmem:[%s429 + $0x19] sm:$0xff]
        %v530 = vld [vmem:[%s429 + $0x21] sm:$0xff]
        %v531 = vld [vmem:[%s429 + $0x31] sm:$0xff]
        %v532 = vld [vmem:[%s429 + $0x39] sm:$0xff]
        %v533 = vld [vmem:[%s429 + $0x49] sm:$0xff]
        %v534 = vld [vmem:[%s429 + $0x51] sm:$0xff]
        %v535 = vld [vmem:[%s429 + $0x61] sm:$0xff]
        %v536 = vld [vmem:[%s429 + $0x69] sm:$0xff]
        %v537 = vld [vmem:[%s429 + $0x79] sm:$0xff]
        %v538 = vld [vmem:[%s429 + $0x81] sm:$0xff]
        %v539 = vld [vmem:[%s429 + $0x91] sm:$0xff]
        %v540 = vld [vmem:[%s429 + $0x99] sm:$0xff]
        %v541 = vld [vmem:[%s429 + $0xa9] sm:$0xff]
        %v542 = vld [vmem:[%s429 + $0xb1] sm:$0xff]
        %559 = vrot.lane.b32.xlu0 %v527, 16
        %v560 = vpop.permute.xlu0 %559
        %561 = vrot.lane.b32.xlu0 %v528, 16
        %v562 = vpop.permute.xlu0 %561
        %563 = vrot.lane.b32.xlu0 %v529, 16
        %v564 = vpop.permute.xlu0 %563
        %565 = vrot.lane.b32.xlu0 %v530, 16
        %v566 = vpop.permute.xlu0 %565
        %567 = vrot.lane.b32.xlu0 %v531, 16
        %v568 = vpop.permute.xlu0 %567
        %569 = vrot.lane.b32.xlu0 %v532, 16
        %v570 = vpop.permute.xlu0 %569
        %571 = vrot.lane.b32.xlu0 %v533, 16
        %v572 = vpop.permute.xlu0 %571
        %573 = vrot.lane.b32.xlu0 %v534, 16
        %v574 = vpop.permute.xlu0 %573
        %575 = vrot.lane.b32.xlu0 %v535, 16
        %v576 = vpop.permute.xlu0 %575
        %577 = vrot.lane.b32.xlu0 %v536, 16
        %v578 = vpop.permute.xlu0 %577
        %579 = vrot.lane.b32.xlu0 %v537, 16
        %v580 = vpop.permute.xlu0 %579
        %581 = vrot.lane.b32.xlu0 %v538, 16
        %v582 = vpop.permute.xlu0 %581
        %583 = vrot.lane.b32.xlu0 %v539, 16
        %v584 = vpop.permute.xlu0 %583
        %585 = vrot.lane.b32.xlu0 %v540, 16
        %v586 = vpop.permute.xlu0 %585
        %587 = vrot.lane.b32.xlu0 %v541, 16
        %v588 = vpop.permute.xlu0 %587
        %589 = vrot.lane.b32.xlu0 %v542, 16
        %v590 = vpop.permute.xlu0 %589
        %vm607 = vcmask 162944
        %608 = vst.msk [vmem:[#allocation2] sm:$0xff] %vm607, %v560
        %609 = vst.msk [vmem:[#allocation2 + $0x8] sm:$0xff] %vm607, %v562
        %610 = vst.msk [vmem:[#allocation2 + $0x10] sm:$0xff] %vm607, %v564
        %611 = vst.msk [vmem:[#allocation2 + $0x18] sm:$0xff] %vm607, %v566
        %612 = vst.msk [vmem:[#allocation2 + $0x20] sm:$0xff] %vm607, %v568
        %613 = vst.msk [vmem:[#allocation2 + $0x28] sm:$0xff] %vm607, %v570
        %614 = vst.msk [vmem:[#allocation2 + $0x30] sm:$0xff] %vm607, %v572
        %615 = vst.msk [vmem:[#allocation2 + $0x38] sm:$0xff] %vm607, %v574
        %616 = vst.msk [vmem:[#allocation2 + $0x40] sm:$0xff] %vm607, %v576
        %617 = vst.msk [vmem:[#allocation2 + $0x48] sm:$0xff] %vm607, %v578
        %618 = vst.msk [vmem:[#allocation2 + $0x50] sm:$0xff] %vm607, %v580
        %619 = vst.msk [vmem:[#allocation2 + $0x58] sm:$0xff] %vm607, %v582
        %620 = vst.msk [vmem:[#allocation2 + $0x60] sm:$0xff] %vm607, %v584
        %621 = vst.msk [vmem:[#allocation2 + $0x68] sm:$0xff] %vm607, %v586
        %622 = vst.msk [vmem:[#allocation2 + $0x70] sm:$0xff] %vm607, %v588
        %623 = vst.msk [vmem:[#allocation2 + $0x78] sm:$0xff] %vm607, %v590
        %v624 = vld [vmem:[%s429 + $0x2] sm:$0xff]
        %v625 = vld [vmem:[%s429 + $0xa] sm:$0xff]
        %v626 = vld [vmem:[%s429 + $0x1a] sm:$0xff]
        %v627 = vld [vmem:[%s429 + $0x22] sm:$0xff]
        %v628 = vld [vmem:[%s429 + $0x32] sm:$0xff]
        %v629 = vld [vmem:[%s429 + $0x3a] sm:$0xff]
        %v630 = vld [vmem:[%s429 + $0x4a] sm:$0xff]
        %v631 = vld [vmem:[%s429 + $0x52] sm:$0xff]
        %v632 = vld [vmem:[%s429 + $0x62] sm:$0xff]
        %v633 = vld [vmem:[%s429 + $0x6a] sm:$0xff]
        %v634 = vld [vmem:[%s429 + $0x7a] sm:$0xff]
        %v635 = vld [vmem:[%s429 + $0x82] sm:$0xff]
        %v636 = vld [vmem:[%s429 + $0x92] sm:$0xff]
        %v637 = vld [vmem:[%s429 + $0x9a] sm:$0xff]
        %v638 = vld [vmem:[%s429 + $0xaa] sm:$0xff]
        %v639 = vld [vmem:[%s429 + $0xb2] sm:$0xff]
        %656 = vrot.lane.b32.xlu0 %v624, 20
        %v657 = vpop.permute.xlu0 %656
        %658 = vrot.lane.b32.xlu0 %v625, 20
        %v659 = vpop.permute.xlu0 %658
        %660 = vrot.lane.b32.xlu0 %v626, 20
        %v661 = vpop.permute.xlu0 %660
        %662 = vrot.lane.b32.xlu0 %v627, 20
        %v663 = vpop.permute.xlu0 %662
        %664 = vrot.lane.b32.xlu0 %v628, 20
        %v665 = vpop.permute.xlu0 %664
        %666 = vrot.lane.b32.xlu0 %v629, 20
        %v667 = vpop.permute.xlu0 %666
        %668 = vrot.lane.b32.xlu0 %v630, 20
        %v669 = vpop.permute.xlu0 %668
        %670 = vrot.lane.b32.xlu0 %v631, 20
        %v671 = vpop.permute.xlu0 %670
        %672 = vrot.lane.b32.xlu0 %v632, 20
        %v673 = vpop.permute.xlu0 %672
        %674 = vrot.lane.b32.xlu0 %v633, 20
        %v675 = vpop.permute.xlu0 %674
        %676 = vrot.lane.b32.xlu0 %v634, 20
        %v677 = vpop.permute.xlu0 %676
        %678 = vrot.lane.b32.xlu0 %v635, 20
        %v679 = vpop.permute.xlu0 %678
        %680 = vrot.lane.b32.xlu0 %v636, 20
        %v681 = vpop.permute.xlu0 %680
        %682 = vrot.lane.b32.xlu0 %v637, 20
        %v683 = vpop.permute.xlu0 %682
        %684 = vrot.lane.b32.xlu0 %v638, 20
        %v685 = vpop.permute.xlu0 %684
        %686 = vrot.lane.b32.xlu0 %v639, 20
        %v687 = vpop.permute.xlu0 %686
        %vm704 = vcmask 195744
        %705 = vst.msk [vmem:[#allocation2] sm:$0xff] %vm704, %v657
        %706 = vst.msk [vmem:[#allocation2 + $0x8] sm:$0xff] %vm704, %v659
        %707 = vst.msk [vmem:[#allocation2 + $0x10] sm:$0xff] %vm704, %v661
        %708 = vst.msk [vmem:[#allocation2 + $0x18] sm:$0xff] %vm704, %v663
        %709 = vst.msk [vmem:[#allocation2 + $0x20] sm:$0xff] %vm704, %v665
        %710 = vst.msk [vmem:[#allocation2 + $0x28] sm:$0xff] %vm704, %v667
        %711 = vst.msk [vmem:[#allocation2 + $0x30] sm:$0xff] %vm704, %v669
        %712 = vst.msk [vmem:[#allocation2 + $0x38] sm:$0xff] %vm704, %v671
        %713 = vst.msk [vmem:[#allocation2 + $0x40] sm:$0xff] %vm704, %v673
        %714 = vst.msk [vmem:[#allocation2 + $0x48] sm:$0xff] %vm704, %v675
        %715 = vst.msk [vmem:[#allocation2 + $0x50] sm:$0xff] %vm704, %v677
        %716 = vst.msk [vmem:[#allocation2 + $0x58] sm:$0xff] %vm704, %v679
        %717 = vst.msk [vmem:[#allocation2 + $0x60] sm:$0xff] %vm704, %v681
        %718 = vst.msk [vmem:[#allocation2 + $0x68] sm:$0xff] %vm704, %v683
        %719 = vst.msk [vmem:[#allocation2 + $0x70] sm:$0xff] %vm704, %v685
        %720 = vst.msk [vmem:[#allocation2 + $0x78] sm:$0xff] %vm704, %v687
        %s721 = sadd.s32 %s197, 2
        %s722 = smul.u32 %s721, 24
        %s723 = scalar_lea.vmem %s195, %s722
        %v724 = vld [vmem:[%s723] sm:$0xff]
        %v725 = vld [vmem:[%s723 + $0x8] sm:$0xff]
        %v726 = vld [vmem:[%s723 + $0x18] sm:$0xff]
        %v727 = vld [vmem:[%s723 + $0x20] sm:$0xff]
        %v728 = vld [vmem:[%s723 + $0x30] sm:$0xff]
        %v729 = vld [vmem:[%s723 + $0x38] sm:$0xff]
        %v730 = vld [vmem:[%s723 + $0x48] sm:$0xff]
        %v731 = vld [vmem:[%s723 + $0x50] sm:$0xff]
        %v732 = vld [vmem:[%s723 + $0x60] sm:$0xff]
        %v733 = vld [vmem:[%s723 + $0x68] sm:$0xff]
        %v734 = vld [vmem:[%s723 + $0x78] sm:$0xff]
        %v735 = vld [vmem:[%s723 + $0x80] sm:$0xff]
        %v736 = vld [vmem:[%s723 + $0x90] sm:$0xff]
        %v737 = vld [vmem:[%s723 + $0x98] sm:$0xff]
        %v738 = vld [vmem:[%s723 + $0xa8] sm:$0xff]
        %v739 = vld [vmem:[%s723 + $0xb0] sm:$0xff]
        %756 = vrot.lane.b32.xlu0 %v724, 24
        %v757 = vpop.permute.xlu0 %756
        %758 = vrot.lane.b32.xlu0 %v725, 24
        %v759 = vpop.permute.xlu0 %758
        %760 = vrot.lane.b32.xlu0 %v726, 24
        %v761 = vpop.permute.xlu0 %760
        %762 = vrot.lane.b32.xlu0 %v727, 24
        %v763 = vpop.permute.xlu0 %762
        %764 = vrot.lane.b32.xlu0 %v728, 24
        %v765 = vpop.permute.xlu0 %764
        %766 = vrot.lane.b32.xlu0 %v729, 24
        %v767 = vpop.permute.xlu0 %766
        %768 = vrot.lane.b32.xlu0 %v730, 24
        %v769 = vpop.permute.xlu0 %768
        %770 = vrot.lane.b32.xlu0 %v731, 24
        %v771 = vpop.permute.xlu0 %770
        %772 = vrot.lane.b32.xlu0 %v732, 24
        %v773 = vpop.permute.xlu0 %772
        %774 = vrot.lane.b32.xlu0 %v733, 24
        %v775 = vpop.permute.xlu0 %774
        %776 = vrot.lane.b32.xlu0 %v734, 24
        %v777 = vpop.permute.xlu0 %776
        %778 = vrot.lane.b32.xlu0 %v735, 24
        %v779 = vpop.permute.xlu0 %778
        %780 = vrot.lane.b32.xlu0 %v736, 24
        %v781 = vpop.permute.xlu0 %780
        %782 = vrot.lane.b32.xlu0 %v737, 24
        %v783 = vpop.permute.xlu0 %782
        %784 = vrot.lane.b32.xlu0 %v738, 24
        %v785 = vpop.permute.xlu0 %784
        %786 = vrot.lane.b32.xlu0 %v739, 24
        %v787 = vpop.permute.xlu0 %786
        %vm804 = vcmask 228544
        %805 = vst.msk [vmem:[#allocation2] sm:$0xff] %vm804, %v757
        %806 = vst.msk [vmem:[#allocation2 + $0x8] sm:$0xff] %vm804, %v759
        %807 = vst.msk [vmem:[#allocation2 + $0x10] sm:$0xff] %vm804, %v761
        %808 = vst.msk [vmem:[#allocation2 + $0x18] sm:$0xff] %vm804, %v763
        %809 = vst.msk [vmem:[#allocation2 + $0x20] sm:$0xff] %vm804, %v765
        %810 = vst.msk [vmem:[#allocation2 + $0x28] sm:$0xff] %vm804, %v767
        %811 = vst.msk [vmem:[#allocation2 + $0x30] sm:$0xff] %vm804, %v769
        %812 = vst.msk [vmem:[#allocation2 + $0x38] sm:$0xff] %vm804, %v771
        %813 = vst.msk [vmem:[#allocation2 + $0x40] sm:$0xff] %vm804, %v773
        %814 = vst.msk [vmem:[#allocation2 + $0x48] sm:$0xff] %vm804, %v775
        %815 = vst.msk [vmem:[#allocation2 + $0x50] sm:$0xff] %vm804, %v777
        %816 = vst.msk [vmem:[#allocation2 + $0x58] sm:$0xff] %vm804, %v779
        %817 = vst.msk [vmem:[#allocation2 + $0x60] sm:$0xff] %vm804, %v781
        %818 = vst.msk [vmem:[#allocation2 + $0x68] sm:$0xff] %vm804, %v783
        %819 = vst.msk [vmem:[#allocation2 + $0x70] sm:$0xff] %vm804, %v785
        %820 = vst.msk [vmem:[#allocation2 + $0x78] sm:$0xff] %vm804, %v787
        %v821 = vld [vmem:[%s723 + $0x1] sm:$0xff]
        %v822 = vld [vmem:[%s723 + $0x9] sm:$0xff]
        %v823 = vld [vmem:[%s723 + $0x19] sm:$0xff]
        %v824 = vld [vmem:[%s723 + $0x21] sm:$0xff]
        %v825 = vld [vmem:[%s723 + $0x31] sm:$0xff]
        %v826 = vld [vmem:[%s723 + $0x39] sm:$0xff]
        %v827 = vld [vmem:[%s723 + $0x49] sm:$0xff]
        %v828 = vld [vmem:[%s723 + $0x51] sm:$0xff]
        %v829 = vld [vmem:[%s723 + $0x61] sm:$0xff]
        %v830 = vld [vmem:[%s723 + $0x69] sm:$0xff]
        %v831 = vld [vmem:[%s723 + $0x79] sm:$0xff]
        %v832 = vld [vmem:[%s723 + $0x81] sm:$0xff]
        %v833 = vld [vmem:[%s723 + $0x91] sm:$0xff]
        %v834 = vld [vmem:[%s723 + $0x99] sm:$0xff]
        %v835 = vld [vmem:[%s723 + $0xa9] sm:$0xff]
        %v836 = vld [vmem:[%s723 + $0xb1] sm:$0xff]
        %853 = vrot.lane.b32.xlu0 %v821, 28
        %v854 = vpop.permute.xlu0 %853
        %855 = vrot.lane.b32.xlu0 %v822, 28
        %v856 = vpop.permute.xlu0 %855
        %857 = vrot.lane.b32.xlu0 %v823, 28
        %v858 = vpop.permute.xlu0 %857
        %859 = vrot.lane.b32.xlu0 %v824, 28
        %v860 = vpop.permute.xlu0 %859
        %861 = vrot.lane.b32.xlu0 %v825, 28
        %v862 = vpop.permute.xlu0 %861
        %863 = vrot.lane.b32.xlu0 %v826, 28
        %v864 = vpop.permute.xlu0 %863
        %865 = vrot.lane.b32.xlu0 %v827, 28
        %v866 = vpop.permute.xlu0 %865
        %867 = vrot.lane.b32.xlu0 %v828, 28
        %v868 = vpop.permute.xlu0 %867
        %869 = vrot.lane.b32.xlu0 %v829, 28
        %v870 = vpop.permute.xlu0 %869
        %871 = vrot.lane.b32.xlu0 %v830, 28
        %v872 = vpop.permute.xlu0 %871
        %873 = vrot.lane.b32.xlu0 %v831, 28
        %v874 = vpop.permute.xlu0 %873
        %875 = vrot.lane.b32.xlu0 %v832, 28
        %v876 = vpop.permute.xlu0 %875
        %877 = vrot.lane.b32.xlu0 %v833, 28
        %v878 = vpop.permute.xlu0 %877
        %879 = vrot.lane.b32.xlu0 %v834, 28
        %v880 = vpop.permute.xlu0 %879
        %881 = vrot.lane.b32.xlu0 %v835, 28
        %v882 = vpop.permute.xlu0 %881
        %883 = vrot.lane.b32.xlu0 %v836, 28
        %v884 = vpop.permute.xlu0 %883
        %vm901 = vcmask 261344
        %902 = vst.msk [vmem:[#allocation2] sm:$0xff] %vm901, %v854
        %903 = vst.msk [vmem:[#allocation2 + $0x8] sm:$0xff] %vm901, %v856
        %904 = vst.msk [vmem:[#allocation2 + $0x10] sm:$0xff] %vm901, %v858
        %905 = vst.msk [vmem:[#allocation2 + $0x18] sm:$0xff] %vm901, %v860
        %906 = vst.msk [vmem:[#allocation2 + $0x20] sm:$0xff] %vm901, %v862
        %907 = vst.msk [vmem:[#allocation2 + $0x28] sm:$0xff] %vm901, %v864
        %908 = vst.msk [vmem:[#allocation2 + $0x30] sm:$0xff] %vm901, %v866
        %909 = vst.msk [vmem:[#allocation2 + $0x38] sm:$0xff] %vm901, %v868
        %910 = vst.msk [vmem:[#allocation2 + $0x40] sm:$0xff] %vm901, %v870
        %911 = vst.msk [vmem:[#allocation2 + $0x48] sm:$0xff] %vm901, %v872
        %912 = vst.msk [vmem:[#allocation2 + $0x50] sm:$0xff] %vm901, %v874
        %913 = vst.msk [vmem:[#allocation2 + $0x58] sm:$0xff] %vm901, %v876
        %914 = vst.msk [vmem:[#allocation2 + $0x60] sm:$0xff] %vm901, %v878
        %915 = vst.msk [vmem:[#allocation2 + $0x68] sm:$0xff] %vm901, %v880
        %916 = vst.msk [vmem:[#allocation2 + $0x70] sm:$0xff] %vm901, %v882
        %917 = vst.msk [vmem:[#allocation2 + $0x78] sm:$0xff] %vm901, %v884
        %v918 = vld [vmem:[%s723 + $0x2] sm:$0xff]
        %v919 = vld [vmem:[%s723 + $0xa] sm:$0xff]
        %v920 = vld [vmem:[%s723 + $0x1a] sm:$0xff]
        %v921 = vld [vmem:[%s723 + $0x22] sm:$0xff]
        %v922 = vld [vmem:[%s723 + $0x32] sm:$0xff]
        %v923 = vld [vmem:[%s723 + $0x3a] sm:$0xff]
        %v924 = vld [vmem:[%s723 + $0x4a] sm:$0xff]
        %v925 = vld [vmem:[%s723 + $0x52] sm:$0xff]
        %v926 = vld [vmem:[%s723 + $0x62] sm:$0xff]
        %v927 = vld [vmem:[%s723 + $0x6a] sm:$0xff]
        %v928 = vld [vmem:[%s723 + $0x7a] sm:$0xff]
        %v929 = vld [vmem:[%s723 + $0x82] sm:$0xff]
        %v930 = vld [vmem:[%s723 + $0x92] sm:$0xff]
        %v931 = vld [vmem:[%s723 + $0x9a] sm:$0xff]
        %v932 = vld [vmem:[%s723 + $0xaa] sm:$0xff]
        %v933 = vld [vmem:[%s723 + $0xb2] sm:$0xff]
        %950 = vrot.lane.b32.xlu0 %v918, 32
        %v951 = vpop.permute.xlu0 %950
        %952 = vrot.lane.b32.xlu0 %v919, 32
        %v953 = vpop.permute.xlu0 %952
        %954 = vrot.lane.b32.xlu0 %v920, 32
        %v955 = vpop.permute.xlu0 %954
        %956 = vrot.lane.b32.xlu0 %v921, 32
        %v957 = vpop.permute.xlu0 %956
        %958 = vrot.lane.b32.xlu0 %v922, 32
        %v959 = vpop.permute.xlu0 %958
        %960 = vrot.lane.b32.xlu0 %v923, 32
        %v961 = vpop.permute.xlu0 %960
        %962 = vrot.lane.b32.xlu0 %v924, 32
        %v963 = vpop.permute.xlu0 %962
        %964 = vrot.lane.b32.xlu0 %v925, 32
        %v965 = vpop.permute.xlu0 %964
        %966 = vrot.lane.b32.xlu0 %v926, 32
        %v967 = vpop.permute.xlu0 %966
        %968 = vrot.lane.b32.xlu0 %v927, 32
        %v969 = vpop.permute.xlu0 %968
        %970 = vrot.lane.b32.xlu0 %v928, 32
        %v971 = vpop.permute.xlu0 %970
        %972 = vrot.lane.b32.xlu0 %v929, 32
        %v973 = vpop.permute.xlu0 %972
        %974 = vrot.lane.b32.xlu0 %v930, 32
        %v975 = vpop.permute.xlu0 %974
        %976 = vrot.lane.b32.xlu0 %v931, 32
        %v977 = vpop.permute.xlu0 %976
        %978 = vrot.lane.b32.xlu0 %v932, 32
        %v979 = vpop.permute.xlu0 %978
        %980 = vrot.lane.b32.xlu0 %v933, 32
        %v981 = vpop.permute.xlu0 %980
        %vm998 = vcmask 294144
        %999 = vst.msk [vmem:[#allocation2] sm:$0xff] %vm998, %v951
        %1000 = vst.msk [vmem:[#allocation2 + $0x8] sm:$0xff] %vm998, %v953
        %1001 = vst.msk [vmem:[#allocation2 + $0x10] sm:$0xff] %vm998, %v955
        %1002 = vst.msk [vmem:[#allocation2 + $0x18] sm:$0xff] %vm998, %v957
        %1003 = vst.msk [vmem:[#allocation2 + $0x20] sm:$0xff] %vm998, %v959
        %1004 = vst.msk [vmem:[#allocation2 + $0x28] sm:$0xff] %vm998, %v961
        %1005 = vst.msk [vmem:[#allocation2 + $0x30] sm:$0xff] %vm998, %v963
        %1006 = vst.msk [vmem:[#allocation2 + $0x38] sm:$0xff] %vm998, %v965
        %1007 = vst.msk [vmem:[#allocation2 + $0x40] sm:$0xff] %vm998, %v967
        %1008 = vst.msk [vmem:[#allocation2 + $0x48] sm:$0xff] %vm998, %v969
        %1009 = vst.msk [vmem:[#allocation2 + $0x50] sm:$0xff] %vm998, %v971
        %1010 = vst.msk [vmem:[#allocation2 + $0x58] sm:$0xff] %vm998, %v973
        %1011 = vst.msk [vmem:[#allocation2 + $0x60] sm:$0xff] %vm998, %v975
        %1012 = vst.msk [vmem:[#allocation2 + $0x68] sm:$0xff] %vm998, %v977
        %1013 = vst.msk [vmem:[#allocation2 + $0x70] sm:$0xff] %vm998, %v979
        %1014 = vst.msk [vmem:[#allocation2 + $0x78] sm:$0xff] %vm998, %v981
        %v1015 = vld [vmem:[#allocation2] sm:$0xff]
        %v1016 = vld [vmem:[#allocation2 + $0x8] sm:$0xff]
        %v1017 = vld [vmem:[#allocation2 + $0x10] sm:$0xff]
        %v1018 = vld [vmem:[#allocation2 + $0x18] sm:$0xff]
        %v1019 = vld [vmem:[#allocation2 + $0x20] sm:$0xff]
        %v1020 = vld [vmem:[#allocation2 + $0x28] sm:$0xff]
        %v1021 = vld [vmem:[#allocation2 + $0x30] sm:$0xff]
        %v1022 = vld [vmem:[#allocation2 + $0x38] sm:$0xff]
        %v1023 = vld [vmem:[#allocation2 + $0x40] sm:$0xff]
        %v1024 = vld [vmem:[#allocation2 + $0x48] sm:$0xff]
        %v1025 = vld [vmem:[#allocation2 + $0x50] sm:$0xff]
        %v1026 = vld [vmem:[#allocation2 + $0x58] sm:$0xff]
        %v1027 = vld [vmem:[#allocation2 + $0x60] sm:$0xff]
        %v1028 = vld [vmem:[#allocation2 + $0x68] sm:$0xff]
        %v1029 = vld [vmem:[#allocation2 + $0x70] sm:$0xff]
        %v1030 = vld [vmem:[#allocation2 + $0x78] sm:$0xff]
        %v1031 = vld [vmem:[%s1] sm:$0xff]
        %v1032 = vld [vmem:[%s1 + $0x8] sm:$0xff]
        %v1033 = vld [vmem:[%s1 + $0x10] sm:$0xff]
        %v1034 = vld [vmem:[%s1 + $0x18] sm:$0xff]
        %v1035 = vld [vmem:[%s1 + $0x20] sm:$0xf]
        %vm1036 = vcmask 293888
        %v1038 = vsel %vm1036, %v1015, 0
        %v1041 = vsel %vm1036, %v1016, 0
        %v1044 = vsel %vm1036, %v1017, 0
        %v1047 = vsel %vm1036, %v1018, 0
        %v1050 = vsel %vm1036, %v1019, 0
        %v1053 = vsel %vm1036, %v1020, 0
        %v1056 = vsel %vm1036, %v1021, 0
        %v1059 = vsel %vm1036, %v1022, 0
        %v1062 = vsel %vm1036, %v1023, 0
        %v1065 = vsel %vm1036, %v1024, 0
        %v1068 = vsel %vm1036, %v1025, 0
        %v1071 = vsel %vm1036, %v1026, 0
        %v1074 = vsel %vm1036, %v1027, 0
        %v1077 = vsel %vm1036, %v1028, 0
        %v1080 = vsel %vm1036, %v1029, 0
        %v1083 = vsel %vm1036, %v1030, 0
        %vm1085 = vcmask 1043456
        %v1087 = vsel %vm1085, %v1035, 0
        %1089 = vmatprep.subr.mxu0 0.0
        %1090 = vmatpush1.msra.mxu0 0.0
        %1091 = vmatprep.subr.mxu0 0.0
        %1092 = vmatpush1.msra.mxu0 0.0
        %1093 = vmatprep.subr.mxu0 0.0
        %1094 = vmatpush1.msra.mxu0 0.0
        %1095 = vmatprep.subr.mxu0 0.0
        %1096 = vmatpush1.msra.mxu0 0.0
        %1097 = vmatprep.subr.mxu0 0.0
        %1098 = vmatpush1.msra.mxu0 0.0
        %1099 = vmatprep.subr.mxu0 0.0
        %1100 = vmatpush1.msra.mxu0 0.0
        %1101 = vmatprep.subr.mxu0 0.0
        %1102 = vmatpush1.msra.mxu0 0.0
        %1103 = vmatprep.subr.mxu0 0.0
        %1104 = vmatpush1.msra.mxu0 0.0
        %1105 = vmatprep.subr.mxu0 0.0
        %1106 = vmatpush1.msra.mxu0 0.0
        %1107 = vmatprep.subr.mxu0 0.0
        %1108 = vmatpush1.msra.mxu0 0.0
        %1109 = vmatprep.subr.mxu0 0.0
        %1110 = vmatpush1.msra.mxu0 0.0
        %1111 = vmatprep.subr.mxu0 0.0
        %1112 = vmatpush1.msra.mxu0 %v1087
        %1113 = vmatprep.subr.mxu0 0.0
        %1114 = vmatpush1.msra.mxu0 %v1034
        %1115 = vmatprep.subr.mxu0 0.0
        %1116 = vmatpush1.msra.mxu0 %v1033
        %1117 = vmatprep.subr.mxu0 0.0
        %1118 = vmatpush1.msra.mxu0 %v1032
        %1119 = vmatprep.subr.mxu0 0.0
        %1120 = vmatpush1.msra.mxu0 %v1031
        %1121 = vmatprep.subr.mxu0 0.0
        %1122 = vmatpush2.msra.mxu0 0.0
        %1123 = vmatprep.subr.mxu0 0.0
        %1124 = vmatpush2.msra.mxu0 0.0
        %1125 = vmatprep.subr.mxu0 0.0
        %1126 = vmatpush2.msra.mxu0 0.0
        %1127 = vmatprep.subr.mxu0 0.0
        %1128 = vmatpush2.msra.mxu0 0.0
        %1129 = vmatprep.subr.mxu0 0.0
        %1130 = vmatpush2.msra.mxu0 0.0
        %1131 = vmatprep.subr.mxu0 0.0
        %1132 = vmatpush2.msra.mxu0 0.0
        %1133 = vmatprep.subr.mxu0 0.0
        %1134 = vmatpush2.msra.mxu0 0.0
        %1135 = vmatprep.subr.mxu0 0.0
        %1136 = vmatpush2.msra.mxu0 0.0
        %1137 = vmatprep.subr.mxu0 0.0
        %1138 = vmatpush2.msra.mxu0 0.0
        %1139 = vmatprep.subr.mxu0 0.0
        %1140 = vmatpush2.msra.mxu0 0.0
        %1141 = vmatprep.subr.mxu0 0.0
        %1142 = vmatpush2.msra.mxu0 0.0
        %1143 = vmatprep.subr.mxu0 0.0
        %1144 = vmatpush2.msra.mxu0 0.0
        %1145 = vmatprep.subr.mxu0 0.0
        %1146 = vmatpush2.msra.mxu0 0.0
        %1147 = vmatprep.subr.mxu0 0.0
        %1148 = vmatpush2.msra.mxu0 0.0
        %1149 = vmatprep.subr.mxu0 0.0
        %1150 = vmatpush2.msra.mxu0 0.0
        %1151 = vmatprep.subr.mxu0 0.0
        %1152 = vmatpush2.msra.mxu0 0.0
        %1153 = vmatprep.mubr.f32.mxu0 0.0
        %1154 = vmatmul.mubr.f32.gmra.mxu0 %v1038
        %v1155 = vpop.f32.mrf.mxu0
        %v1156 = vadd.f32 0.0, %v1155
        %v1157 = vpop.f32.mrf.mxu0
        %1158 = vmatprep.mubr.f32.mxu0 0.0
        %1159 = vmatmul.mubr.f32.gmra.mxu0 %v1041
        %v1160 = vpop.f32.mrf.mxu0
        %v1161 = vadd.f32 0.0, %v1160
        %v1162 = vpop.f32.mrf.mxu0
        %1163 = vmatprep.mubr.f32.mxu0 0.0
        %1164 = vmatmul.mubr.f32.gmra.mxu0 %v1044
        %v1165 = vpop.f32.mrf.mxu0
        %v1166 = vadd.f32 0.0, %v1165
        %v1167 = vpop.f32.mrf.mxu0
        %1168 = vmatprep.mubr.f32.mxu0 0.0
        %1169 = vmatmul.mubr.f32.gmra.mxu0 %v1047
        %v1170 = vpop.f32.mrf.mxu0
        %v1171 = vadd.f32 0.0, %v1170
        %v1172 = vpop.f32.mrf.mxu0
        %1173 = vmatprep.mubr.f32.mxu0 0.0
        %1174 = vmatmul.mubr.f32.gmra.mxu0 %v1050
        %v1175 = vpop.f32.mrf.mxu0
        %v1176 = vadd.f32 0.0, %v1175
        %v1177 = vpop.f32.mrf.mxu0
        %1178 = vmatprep.mubr.f32.mxu0 0.0
        %1179 = vmatmul.mubr.f32.gmra.mxu0 %v1053
        %v1180 = vpop.f32.mrf.mxu0
        %v1181 = vadd.f32 0.0, %v1180
        %v1182 = vpop.f32.mrf.mxu0
        %1183 = vmatprep.mubr.f32.mxu0 0.0
        %1184 = vmatmul.mubr.f32.gmra.mxu0 %v1056
        %v1185 = vpop.f32.mrf.mxu0
        %v1186 = vadd.f32 0.0, %v1185
        %v1187 = vpop.f32.mrf.mxu0
        %1188 = vmatprep.mubr.f32.mxu0 0.0
        %1189 = vmatmul.mubr.f32.gmra.mxu0 %v1059
        %v1190 = vpop.f32.mrf.mxu0
        %v1191 = vadd.f32 0.0, %v1190
        %v1192 = vpop.f32.mrf.mxu0
        %1193 = vmatprep.mubr.f32.mxu0 0.0
        %1194 = vmatmul.mubr.f32.gmra.mxu0 %v1062
        %v1195 = vpop.f32.mrf.mxu0
        %v1196 = vadd.f32 0.0, %v1195
        %v1197 = vpop.f32.mrf.mxu0
        %1198 = vmatprep.mubr.f32.mxu0 0.0
        %1199 = vmatmul.mubr.f32.gmra.mxu0 %v1065
        %v1200 = vpop.f32.mrf.mxu0
        %v1201 = vadd.f32 0.0, %v1200
        %v1202 = vpop.f32.mrf.mxu0
        %1203 = vmatprep.mubr.f32.mxu0 0.0
        %1204 = vmatmul.mubr.f32.gmra.mxu0 %v1068
        %v1205 = vpop.f32.mrf.mxu0
        %v1206 = vadd.f32 0.0, %v1205
        %v1207 = vpop.f32.mrf.mxu0
        %1208 = vmatprep.mubr.f32.mxu0 0.0
        %1209 = vmatmul.mubr.f32.gmra.mxu0 %v1071
        %v1210 = vpop.f32.mrf.mxu0
        %v1211 = vadd.f32 0.0, %v1210
        %v1212 = vpop.f32.mrf.mxu0
        %1213 = vmatprep.mubr.f32.mxu0 0.0
        %1214 = vmatmul.mubr.f32.gmra.mxu0 %v1074
        %v1215 = vpop.f32.mrf.mxu0
        %v1216 = vadd.f32 0.0, %v1215
        %v1217 = vpop.f32.mrf.mxu0
        %1218 = vmatprep.mubr.f32.mxu0 0.0
        %1219 = vmatmul.mubr.f32.gmra.mxu0 %v1077
        %v1220 = vpop.f32.mrf.mxu0
        %v1221 = vadd.f32 0.0, %v1220
        %v1222 = vpop.f32.mrf.mxu0
        %1223 = vmatprep.mubr.f32.mxu0 0.0
        %1224 = vmatmul.mubr.f32.gmra.mxu0 %v1080
        %v1225 = vpop.f32.mrf.mxu0
        %v1226 = vadd.f32 0.0, %v1225
        %v1227 = vpop.f32.mrf.mxu0
        %1228 = vmatprep.mubr.f32.mxu0 0.0
        %1229 = vmatmul.mubr.f32.gmra.mxu0 %v1083
        %v1230 = vpop.f32.mrf.mxu0
        %v1231 = vadd.f32 0.0, %v1230
        %v1232 = vpop.f32.mrf.mxu0
        %1233 = vdwg.mxu0
        %1234 = vst [vmem:[%s183] sm:$0xff] %v1156
        %1235 = vst [vmem:[%s183 + $0x8] sm:$0xff] %v1161
        %1236 = vst [vmem:[%s183 + $0x10] sm:$0xff] %v1166
        %1237 = vst [vmem:[%s183 + $0x18] sm:$0xff] %v1171
        %1238 = vst [vmem:[%s183 + $0x20] sm:$0xff] %v1176
        %1239 = vst [vmem:[%s183 + $0x28] sm:$0xff] %v1181
        %1240 = vst [vmem:[%s183 + $0x30] sm:$0xff] %v1186
        %1241 = vst [vmem:[%s183 + $0x38] sm:$0xff] %v1191
        %1242 = vst [vmem:[%s183 + $0x40] sm:$0xff] %v1196
        %1243 = vst [vmem:[%s183 + $0x48] sm:$0xff] %v1201
        %1244 = vst [vmem:[%s183 + $0x50] sm:$0xff] %v1206
        %1245 = vst [vmem:[%s183 + $0x58] sm:$0xff] %v1211
        %1246 = vst [vmem:[%s183 + $0x60] sm:$0xff] %v1216
        %1247 = vst [vmem:[%s183 + $0x68] sm:$0xff] %v1221
        %1248 = vst [vmem:[%s183 + $0x70] sm:$0xff] %v1226
        %1249 = vst [vmem:[%s183 + $0x78] sm:$0xff] %v1231
        %v1250 = vadd.f32 %v1156, %v1161
        %v1251 = vadd.f32 %v1250, %v1166
        %v1252 = vadd.f32 %v1251, %v1171
        %v1253 = vadd.f32 %v1252, %v1176
        %v1254 = vadd.f32 %v1253, %v1181
        %v1255 = vadd.f32 %v1254, %v1186
        %v1256 = vadd.f32 %v1255, %v1191
        %v1257 = vadd.f32 %v1256, %v1196
        %v1258 = vadd.f32 %v1257, %v1201
        %v1259 = vadd.f32 %v1258, %v1206
        %v1260 = vadd.f32 %v1259, %v1211
        %v1261 = vadd.f32 %v1260, %v1216
        %v1262 = vadd.f32 %v1261, %v1221
        %v1263 = vadd.f32 %v1262, %v1226
        %v1264 = vadd.f32 %v1263, %v1231
        %v1265 = vrot.slane %v1264, 4
        %v1266 = vadd.f32 %v1264, %v1265
        %v1267 = vrot.slane %v1266, 2
        %v1268 = vadd.f32 %v1266, %v1267
        %v1269 = vrot.slane %v1268, 1
        %v1270 = vadd.f32 %v1268, %v1269
        %1271 = vst [vmem:[%s190] sm:$0x1] %v1270
        %v1272 = vmul.f32 %v1156, %v1156
        %v1273 = vmul.f32 %v1161, %v1161
        %v1274 = vmul.f32 %v1166, %v1166
        %v1275 = vmul.f32 %v1171, %v1171
        %v1276 = vmul.f32 %v1176, %v1176
        %v1277 = vmul.f32 %v1181, %v1181
        %v1278 = vmul.f32 %v1186, %v1186
        %v1279 = vmul.f32 %v1191, %v1191
        %v1280 = vmul.f32 %v1196, %v1196
        %v1281 = vmul.f32 %v1201, %v1201
        %v1282 = vmul.f32 %v1206, %v1206
        %v1283 = vmul.f32 %v1211, %v1211
        %v1284 = vmul.f32 %v1216, %v1216
        %v1285 = vmul.f32 %v1221, %v1221
        %v1286 = vmul.f32 %v1226, %v1226
        %v1287 = vmul.f32 %v1231, %v1231
        %v1288 = vadd.f32 %v1272, %v1273
        %v1289 = vadd.f32 %v1288, %v1274
        %v1290 = vadd.f32 %v1289, %v1275
        %v1291 = vadd.f32 %v1290, %v1276
        %v1292 = vadd.f32 %v1291, %v1277
        %v1293 = vadd.f32 %v1292, %v1278
        %v1294 = vadd.f32 %v1293, %v1279
        %v1295 = vadd.f32 %v1294, %v1280
        %v1296 = vadd.f32 %v1295, %v1281
        %v1297 = vadd.f32 %v1296, %v1282
        %v1298 = vadd.f32 %v1297, %v1283
        %v1299 = vadd.f32 %v1298, %v1284
        %v1300 = vadd.f32 %v1299, %v1285
        %v1301 = vadd.f32 %v1300, %v1286
        %v1302 = vadd.f32 %v1301, %v1287
        %v1303 = vrot.slane %v1302, 4
        %v1304 = vadd.f32 %v1302, %v1303
        %v1305 = vrot.slane %v1304, 2
        %v1306 = vadd.f32 %v1304, %v1305
        %v1307 = vrot.slane %v1306, 1
        %v1308 = vadd.f32 %v1306, %v1307
        %1309 = vst [vmem:[%s190 + $0x1] sm:$0x1] %v1308
        %s1310 = sand.u32 %s90, 1
        %s1311 = scalar_lea.sflag [#allocation4], %s1310
        %s1312 = sand.u32 %s90, 1
        %s1313 = smul.addr %s1312, 128
        %s1314 = scalar_lea.vmem [#allocation3], %s1313
        %s1315 = sand.u32 %s118, 1
        %s1316 = scalar_lea.sflag [#allocation6], %s1315
        %s1317 = sand.u32 %s118, 1
        %s1318 = smul.addr %s1317, 2
        %s1319 = scalar_lea.vmem [#allocation5], %s1318
        // Predicated region
        $region29: #{tpu_custom_call.1} parent=27 // pred_check
          %p1320 = pneg %p100
        $region30: #{tpu_custom_call.1} parent=27 // pred_check_branch
          %1322 = sbr.rel (%p1320) target = $region32
        $region31: #{tpu_custom_call.1} parent=27 // pred_region
          %s1323 = smul.u32 8, %s26
          %s1325 = ssub.s32 2048, 2048
          %1326 = vsyncadd %s1311, %s1325
          %s1327 = smul.addr %s1323, 2
          %s1328 = smul.addr %s25, 32
          %s1329 = sadd.s32 %s1327, %s1328
          %s1330 = smul.addr %s1329, 128
          %s1331 = scalar_lea.hbm %s2, %s1330
          %s1332 = sshll.u32 %s1314, 4
          %s1333 = int_to_ptr.vmem [resolvable:$true] %s1332
          %1338 = dma.vmem_to_hbm [thread:$0]  %s1333, 2048, %s1331, %s1311, 128, 128, 8
        $region32: #{tpu_custom_call.1} parent=27 // pred_fallthru
          _
        // Predicated region
        $region33: #{tpu_custom_call.1} parent=27 // pred_check
          %p1339 = pneg %p128
        $region34: #{tpu_custom_call.1} parent=27 // pred_check_branch
          %1341 = sbr.rel (%p1339) target = $region36
        $region35: #{tpu_custom_call.1} parent=27 // pred_region
          %s1343 = ssub.s32 32, 32
          %1344 = vsyncadd %s1316, %s1343
          %s1345 = smul.addr %s25, 2
          %s1346 = sadd.s32 %s26, %s1345
          %s1347 = smul.addr %s1346, 32
          %s1348 = scalar_lea.hbm %s3, %s1347
          %s1350 = sshll.u32 %s1319, 4
          %s1351 = int_to_ptr.vmem [resolvable:$true] %s1350
          %1353 = dma.vmem_to_hbm [thread:$0]  %s1351, 32, %s1348, %s1316
        $region36: #{tpu_custom_call.1} parent=27 // pred_fallthru
          _
      $region28: #{tpu_custom_call.1} parent=5 // pred_fallthru
        _
      %p1354 = scmp.le.s32.totalorder 2, %s16
      // Predicated region
      $region37: #{tpu_custom_call.1} parent=5 // pred_check
        %p1355 = pneg %p1354
      $region38: #{tpu_custom_call.1} parent=5 // pred_check_branch
        %1357 = sbr.rel (%p1355) target = $region40
      $region39: #{tpu_custom_call.1} parent=5 // pred_region
        %s1358 = ssub.s32 %s16, 2
        // Predicated region
        $region41: #{tpu_custom_call.1} parent=39 // pred_check
          %p1359 = pneg %p106
        $region42: #{tpu_custom_call.1} parent=39 // pred_check_branch
          %1361 = sbr.rel (%p1359) target = $region44
        $region43: #{tpu_custom_call.1} parent=39 // pred_region
          %s1362 = sand.u32 %s91, 1
          %s1363 = scalar_lea.sflag [#allocation4], %s1362
          %s1364 = sand.u32 %s91, 1
          %s1365 = smul.addr %s1364, 128
          %s1366 = scalar_lea.vmem [#allocation3], %s1365
          %1367 = dma.done %s1363, 2048
        $region44: #{tpu_custom_call.1} parent=39 // pred_fallthru
          _
        // Predicated region
        $region45: #{tpu_custom_call.1} parent=39 // pred_check
          %p1368 = pneg %p134
        $region46: #{tpu_custom_call.1} parent=39 // pred_check_branch
          %1370 = sbr.rel (%p1368) target = $region48
        $region47: #{tpu_custom_call.1} parent=39 // pred_region
          %s1371 = sand.u32 %s119, 1
          %s1372 = scalar_lea.sflag [#allocation6], %s1371
          %s1373 = sand.u32 %s119, 1
          %s1374 = smul.addr %s1373, 2
          %s1375 = scalar_lea.vmem [#allocation5], %s1374
          %1376 = dma.done %s1372, 32
        $region48: #{tpu_custom_call.1} parent=39 // pred_fallthru
          _
      $region40: #{tpu_custom_call.1} parent=5 // pred_fallthru
        _
    $region6: #{tpu_custom_call.1} parent=1 // loop_footer
      %s20 = sadd.s32 1, %s16
    $region7: #{tpu_custom_call.1} parent=1 // loop_footer_branch
      %15 = sbr.rel target = $region3
    $region8: #{tpu_custom_call.1} parent=1 // loop_exit
      _
    %1377 = vsyncpa [#allocation4], 1
    %s1378 = scalar_lea.sflag [#allocation4], 1
    %1379 = vsyncpa %s1378, 1
    %1380 = vsyncpa [#allocation6], 1
    %s1381 = scalar_lea.sflag [#allocation6], 1
    %1382 = vsyncpa %s1381, 1

</llo_original>
